<compile_context>
chip_gen: v6e
topology: v6e:2x2x1
jax: 0.10.0
libtpu: 0.0.40
codegen_flags: <defaults>
</compile_context>

<pallas_src>
import functools

import jax
import jax.numpy as jnp
from jax.experimental import pallas as pl
from jax.experimental.pallas import tpu as pltpu


def _lc_attention_kernel(x_ref, q_ref, wk_ref, wv_ref, wout_ref, seg_ref, segt_ref,
                         o_ref, *, heads, dim_head, approx_recip):
    # x_ref:    (Bb, n, dim)        Bb batch rows per grid step (matmul dtype)
    # q_ref:    (Bb, inner)         last-token Q, scale folded in, fp32
    # wk_ref:   (dim, inner)        resident
    # wv_ref:   (dim, inner)        resident
    # wout_ref: (inner, dim)        resident
    # seg_ref:  (inner, heads)      0/1 "sum within head" matrix, fp32, resident
    # segt_ref: (heads, inner)      0/1 "broadcast per head" matrix, fp32, resident
    # o_ref:    (Bb, dim)
    inner = heads * dim_head
    Bb, n, dim = x_ref.shape

    x2 = x_ref[...].reshape(Bb * n, dim)

    # K / V projections: two wide MXU matmuls, fp32 accumulate.  Separate W_k / W_v
    # (instead of slicing a fused (.., 2*inner) result) avoids non-tile-aligned
    # lane slices when inner is not a multiple of 128.
    k = jnp.dot(x2, wk_ref[...], preferred_element_type=jnp.float32)   # (Bb*n, inner)
    v = jnp.dot(x2, wv_ref[...], preferred_element_type=jnp.float32)   # (Bb*n, inner)

    # scores[b, t, h] = sum_{j in head h} q[b, j] * k[b, t, j]
    # q's broadcast over the token (sublane) axis is fused into the multiply;
    # the per-head sum is ONE small block-diagonal matmul for all heads.
    q = q_ref[...]                                                      # (Bb, inner) fp32
    kq = (k.reshape(Bb, n, inner) * q[:, None, :]).reshape(Bb * n, inner)
    scores = jnp.dot(kq, seg_ref[...],
                     preferred_element_type=jnp.float32)                # (Bb*n, heads)
    scores = scores.reshape(Bb, n, heads)

    # Softmax over the token axis, all (batch, head) pairs at once.
    m = jnp.max(scores, axis=1, keepdims=True)                          # (Bb, 1, heads)
    p = jnp.exp(scores - m)                                             # (Bb, n, heads)
    denom = jnp.sum(p, axis=1, keepdims=True)                           # (Bb, 1, heads)
    if approx_recip:
        inv = pl.reciprocal(denom, approx=True)                         # EUP vrcp
    else:
        inv = 1.0 / denom                                               # exact (parity runs)
    attn = p * inv                                                      # (Bb, n, heads)

    # out[b, j] = sum_t attn[b, t, head(j)] * v[b, t, j]
    attn_full = jnp.dot(attn.reshape(Bb * n, heads), segt_ref[...],
                        preferred_element_type=jnp.float32)             # (Bb*n, inner)
    weighted = (attn_full * v).reshape(Bb, n, inner)
    out = jnp.sum(weighted, axis=1)                                     # (Bb, inner)

    # Output projection (nn.Dropout p=0.0 in eval -> identity; nothing to do).
    proj = jnp.dot(out.astype(wout_ref.dtype), wout_ref[...],
                   preferred_element_type=jnp.float32)                  # (Bb, dim)
    o_ref[...] = proj.astype(o_ref.dtype)


def _choose_block_b(b, n, dim, inner, x_itemsize, vmem_budget, two_cores):
    """Batch rows per grid step.

    Target Bb*n ~ 512 rows in the flattened (Bb*n, dim) K/V matmuls (fills the
    256-wide MXU on v6e/v7x, 4x128 on v5e, amortizes the ~0.35 us per-step
    overhead), capped by the VMEM budget left after resident weights.  Only
    reserve >= 2 grid steps on 2-TensorCore chips (v7x), where
    dimension_semantics=("parallel",) can actually shard the grid.
    """
    target_rows = 512
    block_b = max(1, min(b, max(1, target_rows // max(n, 1))))

    def step_bytes(bb):
        x_blk = 2 * bb * n * dim * x_itemsize       # double-buffered x block
        q_blk = 2 * bb * inner * 4                  # double-buffered q block
        o_blk = 2 * bb * dim * 4                    # double-buffered output block
        inter = 6 * bb * n * inner * 4              # k, v, kq, attn_full, weighted, ...
        return x_blk + q_blk + o_blk + inter

    while block_b > 1 and step_bytes(block_b) > vmem_budget:
        block_b -= 1

    if two_cores and b > 1:
        block_b = min(block_b, -(-b // 2))          # keep >= 2 grid steps (v7x only)

    while b % block_b:
        block_b -= 1                                # no padded tail blocks
    return block_b


def lc_attention(x, w_qkv, w_out, *, heads, dim_head, matmul_dtype=jnp.bfloat16,
                 block_b=None, approx_reciprocal=True, vmem_limit_bytes=None):
    """x: (b, n, dim); w_qkv: (dim, 3*inner); w_out: (inner, dim) (= PyTorch weight.T).

    Returns (b, 1, dim), matching LCAttention.forward (eval mode).
    If the module were built with project_out=False, pass w_out = identity(inner).
    matmul_dtype=None keeps fp32 matmul inputs; approx_reciprocal=False gives an
    exact softmax normalization (use both for strict parity checks).
    """
    b, n, dim = x.shape
    inner = heads * dim_head
    assert w_qkv.shape == (dim, 3 * inner)
    assert w_out.shape == (inner, dim)
    out_dtype = x.dtype

    scale = dim_head ** -0.5
    w_q = w_qkv[:, :inner]
    w_k = w_qkv[:, inner:2 * inner]
    w_v = w_qkv[:, 2 * inner:]

    if matmul_dtype is None:
        xm, w_qm, w_km, w_vm, w_om = x, w_q, w_k, w_v, w_out
    else:
        xm = x.astype(matmul_dtype)
        w_qm = w_q.astype(matmul_dtype)
        w_km = w_k.astype(matmul_dtype)
        w_vm = w_v.astype(matmul_dtype)
        w_om = w_out.astype(matmul_dtype)

    # Q projection hoisted out of the kernel: only the last token, once per forward,
    # full fp32 accumulation, softmax scale folded in.
    q = jnp.dot(xm[:, n - 1, :], w_qm, preferred_element_type=jnp.float32,
                precision=jax.lax.Precision.HIGHEST) * scale            # (b, inner) fp32

    # Constant 0/1 matrices: "sum within head" (inner, heads) and
    # "broadcast per head" (heads, inner).  Built once, passed as resident inputs.
    head_of_col = jnp.arange(inner, dtype=jnp.int32) // dim_head
    seg = (head_of_col[:, None] == jnp.arange(heads, dtype=jnp.int32)[None, :]
           ).astype(jnp.float32)                                        # (inner, heads)
    seg_t = seg.T                                                       # (heads, inner)

    # Chip-aware sizing: VMEM capacity and TensorCore count.
    try:
        vmem_cap = int(pltpu.get_tpu_info().vmem_capacity_bytes)
    except Exception:
        vmem_cap = 64 * 1024 * 1024                 # conservative (v7x per-TC size)
    try:
        kind = jax.devices()[0].device_kind.lower()
        two_cores = ("v7" in kind) or ("tpu7" in kind) or ("7x" in kind)
    except Exception:
        two_cores = False

    wt_itemsize = jnp.dtype(w_km.dtype).itemsize
    weight_bytes = ((w_km.size + w_vm.size + w_om.size) * wt_itemsize
                    + (seg.size + seg_t.size) * 4)
    # Budget: ~60% of VMEM, minus weights (counted twice in case single-buffering
    # is unavailable and they end up double-buffered).
    vmem_budget = max(int(0.6 * vmem_cap) - 2 * weight_bytes, 2 * 1024 * 1024)

    if block_b is None:
        block_b = _choose_block_b(b, n, dim, inner, jnp.dtype(xm.dtype).itemsize,
                                  vmem_budget, two_cores)
    assert b % block_b == 0, "block_b must divide the batch (padded tail blocks " \
                             "would run softmax over garbage rows)"

    if vmem_limit_bytes is None:
        vmem_limit = int(0.9 * vmem_cap)
    else:
        vmem_limit = int(vmem_limit_bytes)

    kernel = functools.partial(_lc_attention_kernel, heads=heads, dim_head=dim_head,
                               approx_recip=approx_reciprocal)

    def _run(single_buffer_weights):
        res_kw = ({"pipeline_mode": pl.Buffered(1)}
                  if single_buffer_weights else {})
        in_specs = [
            pl.BlockSpec((block_b, n, dim), lambda i: (i, 0, 0)),        # x slab
            pl.BlockSpec((block_b, inner), lambda i: (i, 0)),            # last-token Q
            pl.BlockSpec((dim, inner), lambda i: (0, 0), **res_kw),      # W_k (resident)
            pl.BlockSpec((dim, inner), lambda i: (0, 0), **res_kw),      # W_v (resident)
            pl.BlockSpec((inner, dim), lambda i: (0, 0), **res_kw),      # W_out (resident)
            pl.BlockSpec((inner, heads), lambda i: (0, 0), **res_kw),    # seg (resident)
            pl.BlockSpec((heads, inner), lambda i: (0, 0), **res_kw),    # seg_t (resident)
        ]
        return pl.pallas_call(
            kernel,
            out_shape=jax.ShapeDtypeStruct((b, dim), out_dtype),
            grid=(pl.cdiv(b, block_b),),
            in_specs=in_specs,
            out_specs=pl.BlockSpec((block_b, dim), lambda i: (i, 0)),
            compiler_params=pltpu.CompilerParams(
                dimension_semantics=("parallel",),
                vmem_limit_bytes=vmem_limit),
        )(xm, q, w_km, w_vm, w_om, seg, seg_t)

    try:
        out2d = _run(True)
    except Exception:
        # Fallback for JAX builds that reject pipeline_mode=pl.Buffered(1) on
        # pallas_call BlockSpecs; weights then just get default double-buffering.
        out2d = _run(False)

    return out2d.reshape(b, 1, dim)


def lc_attention_ref(x, w_qkv, w_out, *, heads, dim_head):
    """Pure-JAX fp32 reference matching the PyTorch forward."""
    b, n, dim = x.shape
    inner = heads * dim_head
    scale = dim_head ** -0.5
    qkv = x @ w_qkv                                        # (b, n, 3*inner)
    q, k, v = jnp.split(qkv, 3, axis=-1)                   # each (b, n, inner)

    def to_bhnd(t):
        return t.reshape(b, n, heads, dim_head).transpose(0, 2, 1, 3)

    q, k, v = map(to_bhnd, (q, k, v))                      # (b, h, n, d)
    q = q[:, :, -1:, :]                                    # (b, h, 1, d)
    dots = jnp.einsum('bhid,bhjd->bhij', q, k) * scale     # (b, h, 1, n)
    attn = jax.nn.softmax(dots, axis=-1)
    out = jnp.einsum('bhij,bhjd->bhid', attn, v)           # (b, h, 1, d)
    out = out.transpose(0, 2, 1, 3).reshape(b, 1, inner)   # (b, 1, inner)
    return out @ w_out                                     # (b, 1, dim)


if __name__ == "__main__":
    # Small shapes consistent with the module: dim=32, heads=4, dim_head=8
    # -> inner_dim=32, project_out=True (heads != 1).
    B, N, DIM = 2, 8, 32
    HEADS, DIM_HEAD = 4, 8
    INNER = HEADS * DIM_HEAD

    key = jax.random.PRNGKey(0)
    kx, kq, ko = jax.random.split(key, 3)

    x = jax.random.normal(kx, (B, N, DIM), dtype=jnp.float32)
    # Deterministic synthetic weights (stored as (in, out), i.e. PyTorch weight.T).
    w_qkv = jax.random.normal(kq, (DIM, 3 * INNER), dtype=jnp.float32) * (DIM ** -0.5)
    w_out = jax.random.normal(ko, (INNER, DIM), dtype=jnp.float32) * (INNER ** -0.5)

    ref = lc_attention_ref(x, w_qkv, w_out, heads=HEADS, dim_head=DIM_HEAD)

    # 1) Parity configuration: fp32 matmul inputs + exact reciprocal -> tight check.
    out_fp32 = lc_attention(x, w_qkv, w_out, heads=HEADS, dim_head=DIM_HEAD,
                            matmul_dtype=None, approx_reciprocal=False)
    out_fp32 = jax.block_until_ready(out_fp32)
    assert out_fp32.shape == (B, 1, DIM)
    err = float(jnp.max(jnp.abs(out_fp32 - ref)))
    assert err < 5e-3, f"fp32 parity path max abs err {err}"

    # 2) Default fast configuration: bf16 MXU inputs (fp32 accumulation) + approx
    #    EUP reciprocal; compared against the fp32 reference at bf16-level tolerance.
    out_fast = lc_attention(x, w_qkv, w_out, heads=HEADS, dim_head=DIM_HEAD)
    out_fast = jax.block_until_ready(out_fast)
    assert out_fast.shape == (B, 1, DIM)
    err = float(jnp.max(jnp.abs(out_fast - ref)))
    assert err < 1e-1, f"bf16 fast path max abs err {err}"

    print("KERNEL_OK")
</pallas_src>

<mosaic_0001>
module attributes {stable_mosaic.version = 11 : i64} {
  func.func @_lc_attention_kernel(%arg0: i32, %arg1: memref<2x8x32xf32, #tpu.memory_space<vmem>>, %arg2: memref<2x32xf32, #tpu.memory_space<vmem>>, %arg3: memref<32x32xf32, #tpu.memory_space<vmem>>, %arg4: memref<32x32xf32, #tpu.memory_space<vmem>>, %arg5: memref<32x32xf32, #tpu.memory_space<vmem>>, %arg6: memref<32x4xf32, #tpu.memory_space<vmem>>, %arg7: memref<4x32xf32, #tpu.memory_space<vmem>>, %arg8: memref<2x32xf32, #tpu.memory_space<vmem>>) attributes {dimension_semantics = [#tpu.dimension_semantics<parallel>], iteration_bounds = array<i64: 1>, scalar_prefetch = 0 : i64, scratch_operands = 0 : i64, tpu.core_type = #tpu.core_type<tc>, window_params = [{transform_indices = @transform_0, window_bounds = array<i64: 2, 8, 32>}, {transform_indices = @transform_1, window_bounds = array<i64: 2, 32>}, {pipeline_mode = #tpu.pipeline_mode<synchronous>, transform_indices = @transform_2, window_bounds = array<i64: 32, 32>}, {pipeline_mode = #tpu.pipeline_mode<synchronous>, transform_indices = @transform_3, window_bounds = array<i64: 32, 32>}, {pipeline_mode = #tpu.pipeline_mode<synchronous>, transform_indices = @transform_4, window_bounds = array<i64: 32, 32>}, {pipeline_mode = #tpu.pipeline_mode<synchronous>, transform_indices = @transform_5, window_bounds = array<i64: 32, 4>}, {pipeline_mode = #tpu.pipeline_mode<synchronous>, transform_indices = @transform_6, window_bounds = array<i64: 4, 32>}, {transform_indices = @transform_7, window_bounds = array<i64: 2, 32>}]} {
    %c0 = arith.constant 0 : index
    %c0_0 = arith.constant 0 : index
    %c0_1 = arith.constant 0 : index
    %0 = vector.load %arg1[%c0, %c0_0, %c0_1] : memref<2x8x32xf32, #tpu.memory_space<vmem>>, vector<2x8x32xf32>
    %1 = vector.shape_cast %0 : vector<2x8x32xf32> to vector<16x32xf32>
    %c0_2 = arith.constant 0 : index
    %c0_3 = arith.constant 0 : index
    %2 = vector.load %arg3[%c0_2, %c0_3] : memref<32x32xf32, #tpu.memory_space<vmem>>, vector<32x32xf32>
    %cst = arith.constant dense<0.000000e+00> : vector<16x32xf32>
    %3 = tpu.matmul %1, %2, %cst {dimension_numbers = #tpu.dot_dimension_numbers<[1], [0], [0], [1], [0, 0, 1, 1], [], []>} : vector<16x32xf32>, vector<32x32xf32>, vector<16x32xf32> -> vector<16x32xf32>
    %c0_4 = arith.constant 0 : index
    %c0_5 = arith.constant 0 : index
    %4 = vector.load %arg4[%c0_4, %c0_5] : memref<32x32xf32, #tpu.memory_space<vmem>>, vector<32x32xf32>
    %cst_6 = arith.constant dense<0.000000e+00> : vector<16x32xf32>
    %5 = tpu.matmul %1, %4, %cst_6 {dimension_numbers = #tpu.dot_dimension_numbers<[1], [0], [0], [1], [0, 0, 1, 1], [], []>} : vector<16x32xf32>, vector<32x32xf32>, vector<16x32xf32> -> vector<16x32xf32>
    %c0_7 = arith.constant 0 : index
    %c0_8 = arith.constant 0 : index
    %6 = vector.load %arg2[%c0_7, %c0_8] : memref<2x32xf32, #tpu.memory_space<vmem>>, vector<2x32xf32>
    %7 = vector.shape_cast %3 : vector<16x32xf32> to vector<2x8x32xf32>
    %8 = vector.shape_cast %6 : vector<2x32xf32> to vector<2x1x32xf32>
    %9 = vector.broadcast %8 : vector<2x1x32xf32> to vector<2x8x32xf32>
    %10 = arith.mulf %7, %9 : vector<2x8x32xf32>
    %11 = vector.shape_cast %10 : vector<2x8x32xf32> to vector<16x32xf32>
    %c0_9 = arith.constant 0 : index
    %c0_10 = arith.constant 0 : index
    %12 = vector.load %arg6[%c0_9, %c0_10] : memref<32x4xf32, #tpu.memory_space<vmem>>, vector<32x4xf32>
    %cst_11 = arith.constant dense<0.000000e+00> : vector<16x4xf32>
    %13 = tpu.matmul %11, %12, %cst_11 {dimension_numbers = #tpu.dot_dimension_numbers<[1], [0], [0], [1], [0, 0, 1, 1], [], []>} : vector<16x32xf32>, vector<32x4xf32>, vector<16x4xf32> -> vector<16x4xf32>
    %14 = vector.shape_cast %13 : vector<16x4xf32> to vector<2x8x4xf32>
    %cst_12 = arith.constant dense<0xFF800000> : vector<2x4xf32>
    %15 = vector.multi_reduction <maximumf>, %14, %cst_12 [1] : vector<2x8x4xf32> to vector<2x4xf32>
    %16 = vector.shape_cast %15 : vector<2x4xf32> to vector<2x1x4xf32>
    %17 = vector.broadcast %16 : vector<2x1x4xf32> to vector<2x8x4xf32>
    %18 = arith.subf %14, %17 : vector<2x8x4xf32>
    %19 = math.exp %18 : vector<2x8x4xf32>
    %cst_13 = arith.constant dense<0.000000e+00> : vector<2x4xf32>
    %20 = vector.multi_reduction <add>, %19, %cst_13 [1] : vector<2x8x4xf32> to vector<2x4xf32>
    %21 = vector.shape_cast %20 : vector<2x4xf32> to vector<2x1x4xf32>
    %cst_14 = arith.constant 1.000000e+00 : f32
    %22 = vector.broadcast %cst_14 : f32 to vector<2x1x4xf32>
    %23 = arith.divf %22, %21 : vector<2x1x4xf32>
    %24 = vector.broadcast %23 : vector<2x1x4xf32> to vector<2x8x4xf32>
    %25 = arith.mulf %19, %24 : vector<2x8x4xf32>
    %26 = vector.shape_cast %25 : vector<2x8x4xf32> to vector<16x4xf32>
    %c0_15 = arith.constant 0 : index
    %c0_16 = arith.constant 0 : index
    %27 = vector.load %arg7[%c0_15, %c0_16] : memref<4x32xf32, #tpu.memory_space<vmem>>, vector<4x32xf32>
    %cst_17 = arith.constant dense<0.000000e+00> : vector<16x32xf32>
    %28 = tpu.matmul %26, %27, %cst_17 {dimension_numbers = #tpu.dot_dimension_numbers<[1], [0], [0], [1], [0, 0, 1, 1], [], []>} : vector<16x4xf32>, vector<4x32xf32>, vector<16x32xf32> -> vector<16x32xf32>
    %29 = arith.mulf %28, %5 : vector<16x32xf32>
    %30 = vector.shape_cast %29 : vector<16x32xf32> to vector<2x8x32xf32>
    %cst_18 = arith.constant dense<0.000000e+00> : vector<2x32xf32>
    %31 = vector.multi_reduction <add>, %30, %cst_18 [1] : vector<2x8x32xf32> to vector<2x32xf32>
    %c0_19 = arith.constant 0 : index
    %c0_20 = arith.constant 0 : index
    %32 = vector.load %arg5[%c0_19, %c0_20] : memref<32x32xf32, #tpu.memory_space<vmem>>, vector<32x32xf32>
    %cst_21 = arith.constant dense<0.000000e+00> : vector<2x32xf32>
    %33 = tpu.matmul %31, %32, %cst_21 {dimension_numbers = #tpu.dot_dimension_numbers<[1], [0], [0], [1], [0, 0, 1, 1], [], []>} : vector<2x32xf32>, vector<32x32xf32>, vector<2x32xf32> -> vector<2x32xf32>
    %c0_22 = arith.constant 0 : index
    %c0_23 = arith.constant 0 : index
    %34 = vector.load %arg8[%c0_22, %c0_23] : memref<2x32xf32, #tpu.memory_space<vmem>>, vector<2x32xf32>
    tpu.vector_store %arg8[%c0_22, %c0_23], %33 {strides = array<i32>} : memref<2x32xf32, #tpu.memory_space<vmem>>, vector<2x32xf32>,
    return
  }
  func.func @transform_0(%arg0: i32) -> (i32, i32, i32) {
    %c0_i32 = arith.constant 0 : i32
    %c0_i32_0 = arith.constant 0 : i32
    %c0_i32_1 = arith.constant 0 : i32
    return %arg0, %c0_i32, %c0_i32_0 : i32, i32, i32
  }
  func.func @transform_1(%arg0: i32) -> (i32, i32) {
    %c0_i32 = arith.constant 0 : i32
    %c0_i32_0 = arith.constant 0 : i32
    return %arg0, %c0_i32 : i32, i32
  }
  func.func @transform_2(%arg0: i32) -> (i32, i32) {
    %c0_i32 = arith.constant 0 : i32
    %c0_i32_0 = arith.constant 0 : i32
    %c0_i32_1 = arith.constant 0 : i32
    return %c0_i32, %c0_i32_0 : i32, i32
  }
  func.func @transform_3(%arg0: i32) -> (i32, i32) {
    %c0_i32 = arith.constant 0 : i32
    %c0_i32_0 = arith.constant 0 : i32
    %c0_i32_1 = arith.constant 0 : i32
    return %c0_i32, %c0_i32_0 : i32, i32
  }
  func.func @transform_4(%arg0: i32) -> (i32, i32) {
    %c0_i32 = arith.constant 0 : i32
    %c0_i32_0 = arith.constant 0 : i32
    %c0_i32_1 = arith.constant 0 : i32
    return %c0_i32, %c0_i32_0 : i32, i32
  }
  func.func @transform_5(%arg0: i32) -> (i32, i32) {
    %c0_i32 = arith.constant 0 : i32
    %c0_i32_0 = arith.constant 0 : i32
    %c0_i32_1 = arith.constant 0 : i32
    return %c0_i32, %c0_i32_0 : i32, i32
  }
  func.func @transform_6(%arg0: i32) -> (i32, i32) {
    %c0_i32 = arith.constant 0 : i32
    %c0_i32_0 = arith.constant 0 : i32
    %c0_i32_1 = arith.constant 0 : i32
    return %c0_i32, %c0_i32_0 : i32, i32
  }
  func.func @transform_7(%arg0: i32) -> (i32, i32) {
    %c0_i32 = arith.constant 0 : i32
    %c0_i32_0 = arith.constant 0 : i32
    return %arg0, %c0_i32 : i32, i32
  }
}

module attributes {stable_mosaic.version = 11 : i64} {
  func.func @_lc_attention_kernel(%arg0: i32, %arg1: memref<2x8x32xf32, #tpu.memory_space<vmem>>, %arg2: memref<2x32xf32, #tpu.memory_space<vmem>>, %arg3: memref<32x32xf32, #tpu.memory_space<vmem>>, %arg4: memref<32x32xf32, #tpu.memory_space<vmem>>, %arg5: memref<32x32xf32, #tpu.memory_space<vmem>>, %arg6: memref<32x4xf32, #tpu.memory_space<vmem>>, %arg7: memref<4x32xf32, #tpu.memory_space<vmem>>, %arg8: memref<2x32xf32, #tpu.memory_space<vmem>>) attributes {dimension_semantics = [#tpu.dimension_semantics<parallel>], iteration_bounds = array<i64: 1>, scalar_prefetch = 0 : i64, scratch_operands = 0 : i64, tpu.core_type = #tpu.core_type<tc>, window_params = [{transform_indices = @transform_0, window_bounds = array<i64: 2, 8, 32>}, {transform_indices = @transform_1, window_bounds = array<i64: 2, 32>}, {pipeline_mode = #tpu.pipeline_mode<synchronous>, transform_indices = @transform_2, window_bounds = array<i64: 32, 32>}, {pipeline_mode = #tpu.pipeline_mode<synchronous>, transform_indices = @transform_3, window_bounds = array<i64: 32, 32>}, {pipeline_mode = #tpu.pipeline_mode<synchronous>, transform_indices = @transform_4, window_bounds = array<i64: 32, 32>}, {pipeline_mode = #tpu.pipeline_mode<synchronous>, transform_indices = @transform_5, window_bounds = array<i64: 32, 4>}, {pipeline_mode = #tpu.pipeline_mode<synchronous>, transform_indices = @transform_6, window_bounds = array<i64: 4, 32>}, {transform_indices = @transform_7, window_bounds = array<i64: 2, 32>}]} {
    %c0 = arith.constant 0 : index
    %c0_0 = arith.constant 0 : index
    %c0_1 = arith.constant 0 : index
    %0 = vector.load %arg1[%c0, %c0_0, %c0_1] : memref<2x8x32xf32, #tpu.memory_space<vmem>>, vector<2x8x32xf32>
    %1 = vector.shape_cast %0 : vector<2x8x32xf32> to vector<16x32xf32>
    %c0_2 = arith.constant 0 : index
    %c0_3 = arith.constant 0 : index
    %2 = vector.load %arg3[%c0_2, %c0_3] : memref<32x32xf32, #tpu.memory_space<vmem>>, vector<32x32xf32>
    %cst = arith.constant dense<0.000000e+00> : vector<16x32xf32>
    %3 = tpu.matmul %1, %2, %cst {dimension_numbers = #tpu.dot_dimension_numbers<[1], [0], [0], [1], [0, 0, 1, 1], [], []>} : vector<16x32xf32>, vector<32x32xf32>, vector<16x32xf32> -> vector<16x32xf32>
    %c0_4 = arith.constant 0 : index
    %c0_5 = arith.constant 0 : index
    %4 = vector.load %arg4[%c0_4, %c0_5] : memref<32x32xf32, #tpu.memory_space<vmem>>, vector<32x32xf32>
    %cst_6 = arith.constant dense<0.000000e+00> : vector<16x32xf32>
    %5 = tpu.matmul %1, %4, %cst_6 {dimension_numbers = #tpu.dot_dimension_numbers<[1], [0], [0], [1], [0, 0, 1, 1], [], []>} : vector<16x32xf32>, vector<32x32xf32>, vector<16x32xf32> -> vector<16x32xf32>
    %c0_7 = arith.constant 0 : index
    %c0_8 = arith.constant 0 : index
    %6 = vector.load %arg2[%c0_7, %c0_8] : memref<2x32xf32, #tpu.memory_space<vmem>>, vector<2x32xf32>
    %7 = vector.shape_cast %3 : vector<16x32xf32> to vector<2x8x32xf32>
    %8 = vector.shape_cast %6 : vector<2x32xf32> to vector<2x1x32xf32>
    %9 = vector.broadcast %8 : vector<2x1x32xf32> to vector<2x8x32xf32>
    %10 = arith.mulf %7, %9 : vector<2x8x32xf32>
    %11 = vector.shape_cast %10 : vector<2x8x32xf32> to vector<16x32xf32>
    %c0_9 = arith.constant 0 : index
    %c0_10 = arith.constant 0 : index
    %12 = vector.load %arg6[%c0_9, %c0_10] : memref<32x4xf32, #tpu.memory_space<vmem>>, vector<32x4xf32>
    %cst_11 = arith.constant dense<0.000000e+00> : vector<16x4xf32>
    %13 = tpu.matmul %11, %12, %cst_11 {dimension_numbers = #tpu.dot_dimension_numbers<[1], [0], [0], [1], [0, 0, 1, 1], [], []>} : vector<16x32xf32>, vector<32x4xf32>, vector<16x4xf32> -> vector<16x4xf32>
    %14 = vector.shape_cast %13 : vector<16x4xf32> to vector<2x8x4xf32>
    %cst_12 = arith.constant dense<0xFF800000> : vector<2x4xf32>
    %15 = vector.multi_reduction <maximumf>, %14, %cst_12 [1] : vector<2x8x4xf32> to vector<2x4xf32>
    %16 = vector.shape_cast %15 : vector<2x4xf32> to vector<2x1x4xf32>
    %17 = vector.broadcast %16 : vector<2x1x4xf32> to vector<2x8x4xf32>
    %18 = arith.subf %14, %17 : vector<2x8x4xf32>
    %19 = math.exp %18 : vector<2x8x4xf32>
    %cst_13 = arith.constant dense<0.000000e+00> : vector<2x4xf32>
    %20 = vector.multi_reduction <add>, %19, %cst_13 [1] : vector<2x8x4xf32> to vector<2x4xf32>
    %21 = vector.shape_cast %20 : vector<2x4xf32> to vector<2x1x4xf32>
    %cst_14 = arith.constant 1.000000e+00 : f32
    %22 = vector.broadcast %cst_14 : f32 to vector<2x1x4xf32>
    %23 = arith.divf %22, %21 : vector<2x1x4xf32>
    %24 = vector.broadcast %23 : vector<2x1x4xf32> to vector<2x8x4xf32>
    %25 = arith.mulf %19, %24 : vector<2x8x4xf32>
    %26 = vector.shape_cast %25 : vector<2x8x4xf32> to vector<16x4xf32>
    %c0_15 = arith.constant 0 : index
    %c0_16 = arith.constant 0 : index
    %27 = vector.load %arg7[%c0_15, %c0_16] : memref<4x32xf32, #tpu.memory_space<vmem>>, vector<4x32xf32>
    %cst_17 = arith.constant dense<0.000000e+00> : vector<16x32xf32>
    %28 = tpu.matmul %26, %27, %cst_17 {dimension_numbers = #tpu.dot_dimension_numbers<[1], [0], [0], [1], [0, 0, 1, 1], [], []>} : vector<16x4xf32>, vector<4x32xf32>, vector<16x32xf32> -> vector<16x32xf32>
    %29 = arith.mulf %28, %5 : vector<16x32xf32>
    %30 = vector.shape_cast %29 : vector<16x32xf32> to vector<2x8x32xf32>
    %cst_18 = arith.constant dense<0.000000e+00> : vector<2x32xf32>
    %31 = vector.multi_reduction <add>, %30, %cst_18 [1] : vector<2x8x32xf32> to vector<2x32xf32>
    %c0_19 = arith.constant 0 : index
    %c0_20 = arith.constant 0 : index
    %32 = vector.load %arg5[%c0_19, %c0_20] : memref<32x32xf32, #tpu.memory_space<vmem>>, vector<32x32xf32>
    %cst_21 = arith.constant dense<0.000000e+00> : vector<2x32xf32>
    %33 = tpu.matmul %31, %32, %cst_21 {dimension_numbers = #tpu.dot_dimension_numbers<[1], [0], [0], [1], [0, 0, 1, 1], [], []>} : vector<2x32xf32>, vector<32x32xf32>, vector<2x32xf32> -> vector<2x32xf32>
    %c0_22 = arith.constant 0 : index
    %c0_23 = arith.constant 0 : index
    %34 = vector.load %arg8[%c0_22, %c0_23] : memref<2x32xf32, #tpu.memory_space<vmem>>, vector<2x32xf32>
    tpu.vector_store %arg8[%c0_22, %c0_23], %33 {strides = array<i32>} : memref<2x32xf32, #tpu.memory_space<vmem>>, vector<2x32xf32>,
    return
  }
  func.func @transform_0(%arg0: i32) -> (i32, i32, i32) {
    %c0_i32 = arith.constant 0 : i32
    %c0_i32_0 = arith.constant 0 : i32
    %c0_i32_1 = arith.constant 0 : i32
    return %arg0, %c0_i32, %c0_i32_0 : i32, i32, i32
  }
  func.func @transform_1(%arg0: i32) -> (i32, i32) {
    %c0_i32 = arith.constant 0 : i32
    %c0_i32_0 = arith.constant 0 : i32
    return %arg0, %c0_i32 : i32, i32
  }
  func.func @transform_2(%arg0: i32) -> (i32, i32) {
    %c0_i32 = arith.constant 0 : i32
    %c0_i32_0 = arith.constant 0 : i32
    %c0_i32_1 = arith.constant 0 : i32
    return %c0_i32, %c0_i32_0 : i32, i32
  }
  func.func @transform_3(%arg0: i32) -> (i32, i32) {
    %c0_i32 = arith.constant 0 : i32
    %c0_i32_0 = arith.constant 0 : i32
    %c0_i32_1 = arith.constant 0 : i32
    return %c0_i32, %c0_i32_0 : i32, i32
  }
  func.func @transform_4(%arg0: i32) -> (i32, i32) {
    %c0_i32 = arith.constant 0 : i32
    %c0_i32_0 = arith.constant 0 : i32
    %c0_i32_1 = arith.constant 0 : i32
    return %c0_i32, %c0_i32_0 : i32, i32
  }
  func.func @transform_5(%arg0: i32) -> (i32, i32) {
    %c0_i32 = arith.constant 0 : i32
    %c0_i32_0 = arith.constant 0 : i32
    %c0_i32_1 = arith.constant 0 : i32
    return %c0_i32, %c0_i32_0 : i32, i32
  }
  func.func @transform_6(%arg0: i32) -> (i32, i32) {
    %c0_i32 = arith.constant 0 : i32
    %c0_i32_0 = arith.constant 0 : i32
    %c0_i32_1 = arith.constant 0 : i32
    return %c0_i32, %c0_i32_0 : i32, i32
  }
  func.func @transform_7(%arg0: i32) -> (i32, i32) {
    %c0_i32 = arith.constant 0 : i32
    %c0_i32_0 = arith.constant 0 : i32
    return %arg0, %c0_i32 : i32, i32
  }
}

</mosaic_0001>

<llo_original>
// kernel: tpu_custom_call.1
$region0: #{tpu_custom_call.1}
  #allocation0 [shape = 'u32[]', space=smem, size = 0x4, offset = 0x4, fixed_abs, tag = 'smem constant byte address 0x4 - core index']
  #allocation1 [shape = 'u32[144,128]{1,0:T(1,128)}', space=vmem, size = 0x12000, scoped, tag = 'internal scratch']
  %s0 = inlined_call_operand.hbm [shape: f32[2,8,32], index: 0, kind: input, shape index: {}]
  %s1 = inlined_call_operand.vmem [shape: f32[2,32], index: 1, kind: input, shape index: {}]
  %s2 = inlined_call_operand.vmem [shape: f32[32,32], index: 2, kind: input, shape index: {}]
  %s3 = inlined_call_operand.hbm [shape: f32[32,32], index: 3, kind: input, shape index: {}]
  %s4 = inlined_call_operand.hbm [shape: f32[32,32], index: 4, kind: input, shape index: {}]
  %s5 = inlined_call_operand.vmem [shape: f32[32,4], index: 5, kind: input, shape index: {}]
  %s6 = inlined_call_operand.vmem [shape: f32[4,32], index: 6, kind: input, shape index: {}]
  %s7 = inlined_call_operand.hbm [shape: f32[2,32], index: 7, kind: output, shape index: {}]
  %s8 = sld [smem:[#allocation0]]
  $region50: #{tpu_custom_call.1} parent=0
    _
  %s10 = ssub.s32 1, %s8
  %s11 = scalar_select 0, %s10, %s8
  $region1: #{tpu_custom_call.1} parent=0
    #allocation2 [shape = 'u8[8192]{0}', space=vmem, size = 0x2000, scoped, tag = 'input window, operand 0, single buffered']
    #allocation3 [shape = 's32[1]{0}', space=sflag, size = 0x4, scoped, tag = 'scoped memory for tpu_custom_call.1']
    #allocation4 [shape = 's32[1]{0}', space=sflag, size = 0x4, scoped, tag = 'scoped memory for tpu_custom_call.1']
    #allocation5 [shape = 'u8[16384]{0}', space=vmem, size = 0x4000, scoped, tag = 'input window, operand 3, single buffered']
    #allocation6 [shape = 's32[1]{0}', space=sflag, size = 0x4, scoped, tag = 'scoped memory for tpu_custom_call.1']
    #allocation7 [shape = 'u8[16384]{0}', space=vmem, size = 0x4000, scoped, tag = 'input window, operand 4, single buffered']
    #allocation8 [shape = 'u8[1024]{0}', space=vmem, size = 0x400, scoped, tag = 'output window, operand 0, single buffered']
    %12 = vsyncpa [#allocation3], 0
    %13 = vsyncpa [#allocation6], 0
    %14 = vsyncpa [#allocation4], 0
    // Predicated region
    $region2: #{tpu_custom_call.1} parent=1 // pred_check
      _
    $region3: #{tpu_custom_call.1} parent=1 // pred_check_branch
      %16 = sbr.rel (0) target = $region5
    $region4: #{tpu_custom_call.1} parent=1 // pred_region
      %s18 = ssub.s32 256, 256
      %19 = vsyncadd [#allocation3], %s18
      %s20 = sshll.u32 [#allocation2], 4
      %s21 = int_to_ptr.vmem [resolvable:$true] %s20
      %26 = dma.hbm_to_vmem [thread:$0]  %s0, 256, %s21, [#allocation3], 128, 128, 8
    $region5: #{tpu_custom_call.1} parent=1 // pred_fallthru
      _
    // Predicated region
    $region6: #{tpu_custom_call.1} parent=1 // pred_check
      _
    $region7: #{tpu_custom_call.1} parent=1 // pred_check_branch
      %28 = sbr.rel (0) target = $region9
    $region8: #{tpu_custom_call.1} parent=1 // pred_region
      _
    $region9: #{tpu_custom_call.1} parent=1 // pred_fallthru
      _
    // Predicated region
    $region10: #{tpu_custom_call.1} parent=1 // pred_check
      _
    $region11: #{tpu_custom_call.1} parent=1 // pred_check_branch
      %30 = sbr.rel (0) target = $region13
    $region12: #{tpu_custom_call.1} parent=1 // pred_region
      _
    $region13: #{tpu_custom_call.1} parent=1 // pred_fallthru
      _
    // Predicated region
    $region14: #{tpu_custom_call.1} parent=1 // pred_check
      _
    $region15: #{tpu_custom_call.1} parent=1 // pred_check_branch
      %32 = sbr.rel (0) target = $region17
    $region16: #{tpu_custom_call.1} parent=1 // pred_region
      %s34 = ssub.s32 512, 512
      %35 = vsyncadd [#allocation6], %s34
      %s36 = sshll.u32 [#allocation5], 4
      %s37 = int_to_ptr.vmem [resolvable:$true] %s36
      %42 = dma.hbm_to_vmem [thread:$0]  %s3, 512, %s37, [#allocation6], 128, 128, 8
    $region17: #{tpu_custom_call.1} parent=1 // pred_fallthru
      _
    // Predicated region
    $region18: #{tpu_custom_call.1} parent=1 // pred_check
      _
    $region19: #{tpu_custom_call.1} parent=1 // pred_check_branch
      %44 = sbr.rel (0) target = $region21
    $region20: #{tpu_custom_call.1} parent=1 // pred_region
      %s46 = ssub.s32 512, 512
      %47 = vsyncadd [#allocation6], %s46
      %s48 = sshll.u32 [#allocation7], 4
      %s49 = int_to_ptr.vmem [resolvable:$true] %s48
      %54 = dma.hbm_to_vmem [thread:$0]  %s4, 512, %s49, [#allocation6], 128, 128, 8
    $region21: #{tpu_custom_call.1} parent=1 // pred_fallthru
      _
    // Predicated region
    $region22: #{tpu_custom_call.1} parent=1 // pred_check
      _
    $region23: #{tpu_custom_call.1} parent=1 // pred_check_branch
      %56 = sbr.rel (0) target = $region25
    $region24: #{tpu_custom_call.1} parent=1 // pred_region
      _
    $region25: #{tpu_custom_call.1} parent=1 // pred_fallthru
      _
    // Predicated region
    $region26: #{tpu_custom_call.1} parent=1 // pred_check
      _
    $region27: #{tpu_custom_call.1} parent=1 // pred_check_branch
      %58 = sbr.rel (0) target = $region29
    $region28: #{tpu_custom_call.1} parent=1 // pred_region
      _
    $region29: #{tpu_custom_call.1} parent=1 // pred_fallthru
      _
    // Predicated region
    $region30: #{tpu_custom_call.1} parent=1 // pred_check
      _
    $region31: #{tpu_custom_call.1} parent=1 // pred_check_branch
      %60 = sbr.rel (0) target = $region33
    $region32: #{tpu_custom_call.1} parent=1 // pred_region
      %61 = dma.done [#allocation3], 256
    $region33: #{tpu_custom_call.1} parent=1 // pred_fallthru
      _
    // Predicated region
    $region34: #{tpu_custom_call.1} parent=1 // pred_check
      _
    $region35: #{tpu_custom_call.1} parent=1 // pred_check_branch
      %63 = sbr.rel (0) target = $region37
    $region36: #{tpu_custom_call.1} parent=1 // pred_region
      %64 = dma.done [#allocation6], 512
    $region37: #{tpu_custom_call.1} parent=1 // pred_fallthru
      _
    // Predicated region
    $region38: #{tpu_custom_call.1} parent=1 // pred_check
      _
    $region39: #{tpu_custom_call.1} parent=1 // pred_check_branch
      %66 = sbr.rel (0) target = $region41
    $region40: #{tpu_custom_call.1} parent=1 // pred_region
      %67 = dma.done [#allocation6], 512
    $region41: #{tpu_custom_call.1} parent=1 // pred_fallthru
      _
    %v68 = vld [vmem:[#allocation2] sm:$0xff]
    %v69 = vld [vmem:[#allocation2 + $0x8] sm:$0xff]
    %v70 = vld [vmem:[%s2] sm:$0xff]
    %v71 = vld [vmem:[%s2 + $0x8] sm:$0xff]
    %v72 = vld [vmem:[%s2 + $0x10] sm:$0xff]
    %v73 = vld [vmem:[%s2 + $0x18] sm:$0xff]
    %vm74 = vcmask 261120
    %v76 = vsel %vm74, %v68, 0
    %v79 = vsel %vm74, %v69, 0
    %81 = vmatprep.subr.mxu0 0.0
    %82 = vmatpush1.msra.mxu0 0.0
    %83 = vmatprep.subr.mxu0 0.0
    %84 = vmatpush1.msra.mxu0 0.0
    %85 = vmatprep.subr.mxu0 0.0
    %86 = vmatpush1.msra.mxu0 0.0
    %87 = vmatprep.subr.mxu0 0.0
    %88 = vmatpush1.msra.mxu0 0.0
    %89 = vmatprep.subr.mxu0 0.0
    %90 = vmatpush1.msra.mxu0 0.0
    %91 = vmatprep.subr.mxu0 0.0
    %92 = vmatpush1.msra.mxu0 0.0
    %93 = vmatprep.subr.mxu0 0.0
    %94 = vmatpush1.msra.mxu0 0.0
    %95 = vmatprep.subr.mxu0 0.0
    %96 = vmatpush1.msra.mxu0 0.0
    %97 = vmatprep.subr.mxu0 0.0
    %98 = vmatpush1.msra.mxu0 0.0
    %99 = vmatprep.subr.mxu0 0.0
    %100 = vmatpush1.msra.mxu0 0.0
    %101 = vmatprep.subr.mxu0 0.0
    %102 = vmatpush1.msra.mxu0 0.0
    %103 = vmatprep.subr.mxu0 0.0
    %104 = vmatpush1.msra.mxu0 0.0
    %105 = vmatprep.subr.mxu0 0.0
    %106 = vmatpush1.msra.mxu0 %v73
    %107 = vmatprep.subr.mxu0 0.0
    %108 = vmatpush1.msra.mxu0 %v72
    %109 = vmatprep.subr.mxu0 0.0
    %110 = vmatpush1.msra.mxu0 %v71
    %111 = vmatprep.subr.mxu0 0.0
    %112 = vmatpush1.msra.mxu0 %v70
    %113 = vmatprep.subr.mxu0 0.0
    %114 = vmatpush2.msra.mxu0 0.0
    %115 = vmatprep.subr.mxu0 0.0
    %116 = vmatpush2.msra.mxu0 0.0
    %117 = vmatprep.subr.mxu0 0.0
    %118 = vmatpush2.msra.mxu0 0.0
    %119 = vmatprep.subr.mxu0 0.0
    %120 = vmatpush2.msra.mxu0 0.0
    %121 = vmatprep.subr.mxu0 0.0
    %122 = vmatpush2.msra.mxu0 0.0
    %123 = vmatprep.subr.mxu0 0.0
    %124 = vmatpush2.msra.mxu0 0.0
    %125 = vmatprep.subr.mxu0 0.0
    %126 = vmatpush2.msra.mxu0 0.0
    %127 = vmatprep.subr.mxu0 0.0
    %128 = vmatpush2.msra.mxu0 0.0
    %129 = vmatprep.subr.mxu0 0.0
    %130 = vmatpush2.msra.mxu0 0.0
    %131 = vmatprep.subr.mxu0 0.0
    %132 = vmatpush2.msra.mxu0 0.0
    %133 = vmatprep.subr.mxu0 0.0
    %134 = vmatpush2.msra.mxu0 0.0
    %135 = vmatprep.subr.mxu0 0.0
    %136 = vmatpush2.msra.mxu0 0.0
    %137 = vmatprep.subr.mxu0 0.0
    %138 = vmatpush2.msra.mxu0 0.0
    %139 = vmatprep.subr.mxu0 0.0
    %140 = vmatpush2.msra.mxu0 0.0
    %141 = vmatprep.subr.mxu0 0.0
    %142 = vmatpush2.msra.mxu0 0.0
    %143 = vmatprep.subr.mxu0 0.0
    %144 = vmatpush2.msra.mxu0 0.0
    %145 = vmatprep.mubr.f32.mxu0 0.0
    %146 = vmatmul.mubr.f32.gmra.mxu0 %v76
    %v147 = vpop.f32.mrf.mxu0
    %v148 = vadd.f32 0.0, %v147
    %v149 = vpop.f32.mrf.mxu0
    %150 = vmatprep.mubr.f32.mxu0 0.0
    %151 = vmatmul.mubr.f32.gmra.mxu0 %v79
    %v152 = vpop.f32.mrf.mxu0
    %v153 = vadd.f32 0.0, %v152
    %v154 = vpop.f32.mrf.mxu0
    %155 = vdwg.mxu0
    %v156 = vld [vmem:[#allocation5] sm:$0xff]
    %v157 = vld [vmem:[#allocation5 + $0x8] sm:$0xff]
    %v158 = vld [vmem:[#allocation5 + $0x10] sm:$0xff]
    %v159 = vld [vmem:[#allocation5 + $0x18] sm:$0xff]
    %160 = vmatprep.subr.mxu0 0.0
    %161 = vmatpush1.msra.mxu0 0.0
    %162 = vmatprep.subr.mxu0 0.0
    %163 = vmatpush1.msra.mxu0 0.0
    %164 = vmatprep.subr.mxu0 0.0
    %165 = vmatpush1.msra.mxu0 0.0
    %166 = vmatprep.subr.mxu0 0.0
    %167 = vmatpush1.msra.mxu0 0.0
    %168 = vmatprep.subr.mxu0 0.0
    %169 = vmatpush1.msra.mxu0 0.0
    %170 = vmatprep.subr.mxu0 0.0
    %171 = vmatpush1.msra.mxu0 0.0
    %172 = vmatprep.subr.mxu0 0.0
    %173 = vmatpush1.msra.mxu0 0.0
    %174 = vmatprep.subr.mxu0 0.0
    %175 = vmatpush1.msra.mxu0 0.0
    %176 = vmatprep.subr.mxu0 0.0
    %177 = vmatpush1.msra.mxu0 0.0
    %178 = vmatprep.subr.mxu0 0.0
    %179 = vmatpush1.msra.mxu0 0.0
    %180 = vmatprep.subr.mxu0 0.0
    %181 = vmatpush1.msra.mxu0 0.0
    %182 = vmatprep.subr.mxu0 0.0
    %183 = vmatpush1.msra.mxu0 0.0
    %184 = vmatprep.subr.mxu0 0.0
    %185 = vmatpush1.msra.mxu0 %v159
    %186 = vmatprep.subr.mxu0 0.0
    %187 = vmatpush1.msra.mxu0 %v158
    %188 = vmatprep.subr.mxu0 0.0
    %189 = vmatpush1.msra.mxu0 %v157
    %190 = vmatprep.subr.mxu0 0.0
    %191 = vmatpush1.msra.mxu0 %v156
    %192 = vmatprep.subr.mxu0 0.0
    %193 = vmatpush2.msra.mxu0 0.0
    %194 = vmatprep.subr.mxu0 0.0
    %195 = vmatpush2.msra.mxu0 0.0
    %196 = vmatprep.subr.mxu0 0.0
    %197 = vmatpush2.msra.mxu0 0.0
    %198 = vmatprep.subr.mxu0 0.0
    %199 = vmatpush2.msra.mxu0 0.0
    %200 = vmatprep.subr.mxu0 0.0
    %201 = vmatpush2.msra.mxu0 0.0
    %202 = vmatprep.subr.mxu0 0.0
    %203 = vmatpush2.msra.mxu0 0.0
    %204 = vmatprep.subr.mxu0 0.0
    %205 = vmatpush2.msra.mxu0 0.0
    %206 = vmatprep.subr.mxu0 0.0
    %207 = vmatpush2.msra.mxu0 0.0
    %208 = vmatprep.subr.mxu0 0.0
    %209 = vmatpush2.msra.mxu0 0.0
    %210 = vmatprep.subr.mxu0 0.0
    %211 = vmatpush2.msra.mxu0 0.0
    %212 = vmatprep.subr.mxu0 0.0
    %213 = vmatpush2.msra.mxu0 0.0
    %214 = vmatprep.subr.mxu0 0.0
    %215 = vmatpush2.msra.mxu0 0.0
    %216 = vmatprep.subr.mxu0 0.0
    %217 = vmatpush2.msra.mxu0 0.0
    %218 = vmatprep.subr.mxu0 0.0
    %219 = vmatpush2.msra.mxu0 0.0
    %220 = vmatprep.subr.mxu0 0.0
    %221 = vmatpush2.msra.mxu0 0.0
    %222 = vmatprep.subr.mxu0 0.0
    %223 = vmatpush2.msra.mxu0 0.0
    %224 = vmatprep.mubr.f32.mxu0 0.0
    %225 = vmatmul.mubr.f32.gmra.mxu0 %v76
    %v226 = vpop.f32.mrf.mxu0
    %v227 = vadd.f32 0.0, %v226
    %v228 = vpop.f32.mrf.mxu0
    %229 = vmatprep.mubr.f32.mxu0 0.0
    %230 = vmatmul.mubr.f32.gmra.mxu0 %v79
    %v231 = vpop.f32.mrf.mxu0
    %v232 = vadd.f32 0.0, %v231
    %v233 = vpop.f32.mrf.mxu0
    %234 = vdwg.mxu0
    %v235 = vld [vmem:[%s1] sm:$0x3]
    %v238 = vunpack.c.l.s4 1966171168
    %v239 = vunpack.c.0.s8 %v238
    %v240 = vlaneseq
    %v241 = vshrl.u32 %v240, 7
    %v242 = vsub.s32 %v239, %v241
    %v243 = vrot.slane %v235, %v242
    %v244 = vcombine.high %v243, %v243
    %v246 = vunpack.c.l.s4 1966171168
    %v247 = vunpack.c.0.s8 %v246
    %v248 = vlaneseq
    %v249 = vshrl.u32 %v248, 7
    %v250 = vsub.s32 %v247, %v249
    %v251 = vrot.slane %v243, %v250
    %v253 = vunpack.c.l.s4 1966171168
    %v254 = vunpack.c.0.s8 %v253
    %v255 = vlaneseq
    %v256 = vshrl.u32 %v255, 7
    %v257 = vsub.s32 %v254, %v256
    %v258 = vrot.slane %v244, %v257
    %v259 = vlaneseq
    %v260 = vshrl.u32 %v259, 7
    %v261 = vsub.s32 0, %v260
    %v262 = vrot.slane %v251, %v261
    %v263 = vlaneseq
    %v264 = vshrl.u32 %v263, 7
    %v265 = vsub.s32 0, %v264
    %v266 = vrot.slane %v258, %v265
    %v269 = vmul.f32 %v148, %v262
    %v270 = vmul.f32 %v153, %v266
    %v271 = vld [vmem:[%s5] sm:$0xff]
    %v272 = vld [vmem:[%s5 + $0x8] sm:$0xff]
    %v273 = vld [vmem:[%s5 + $0x10] sm:$0xff]
    %v274 = vld [vmem:[%s5 + $0x18] sm:$0xff]
    %v276 = vsel %vm74, %v269, 0
    %v279 = vsel %vm74, %v270, 0
    %281 = vmatprep.subr.mxu0 0.0
    %282 = vmatpush1.msra.mxu0 0.0
    %283 = vmatprep.subr.mxu0 0.0
    %284 = vmatpush1.msra.mxu0 0.0
    %285 = vmatprep.subr.mxu0 0.0
    %286 = vmatpush1.msra.mxu0 0.0
    %287 = vmatprep.subr.mxu0 0.0
    %288 = vmatpush1.msra.mxu0 0.0
    %289 = vmatprep.subr.mxu0 0.0
    %290 = vmatpush1.msra.mxu0 0.0
    %291 = vmatprep.subr.mxu0 0.0
    %292 = vmatpush1.msra.mxu0 0.0
    %293 = vmatprep.subr.mxu0 0.0
    %294 = vmatpush1.msra.mxu0 0.0
    %295 = vmatprep.subr.mxu0 0.0
    %296 = vmatpush1.msra.mxu0 0.0
    %297 = vmatprep.subr.mxu0 0.0
    %298 = vmatpush1.msra.mxu0 0.0
    %299 = vmatprep.subr.mxu0 0.0
    %300 = vmatpush1.msra.mxu0 0.0
    %301 = vmatprep.subr.mxu0 0.0
    %302 = vmatpush1.msra.mxu0 0.0
    %303 = vmatprep.subr.mxu0 0.0
    %304 = vmatpush1.msra.mxu0 0.0
    %305 = vmatprep.subr.mxu0 0.0
    %306 = vmatpush1.msra.mxu0 %v274
    %307 = vmatprep.subr.mxu0 0.0
    %308 = vmatpush1.msra.mxu0 %v273
    %309 = vmatprep.subr.mxu0 0.0
    %310 = vmatpush1.msra.mxu0 %v272
    %311 = vmatprep.subr.mxu0 0.0
    %312 = vmatpush1.msra.mxu0 %v271
    %313 = vmatprep.subr.mxu0 0.0
    %314 = vmatpush2.msra.mxu0 0.0
    %315 = vmatprep.subr.mxu0 0.0
    %316 = vmatpush2.msra.mxu0 0.0
    %317 = vmatprep.subr.mxu0 0.0
    %318 = vmatpush2.msra.mxu0 0.0
    %319 = vmatprep.subr.mxu0 0.0
    %320 = vmatpush2.msra.mxu0 0.0
    %321 = vmatprep.subr.mxu0 0.0
    %322 = vmatpush2.msra.mxu0 0.0
    %323 = vmatprep.subr.mxu0 0.0
    %324 = vmatpush2.msra.mxu0 0.0
    %325 = vmatprep.subr.mxu0 0.0
    %326 = vmatpush2.msra.mxu0 0.0
    %327 = vmatprep.subr.mxu0 0.0
    %328 = vmatpush2.msra.mxu0 0.0
    %329 = vmatprep.subr.mxu0 0.0
    %330 = vmatpush2.msra.mxu0 0.0
    %331 = vmatprep.subr.mxu0 0.0
    %332 = vmatpush2.msra.mxu0 0.0
    %333 = vmatprep.subr.mxu0 0.0
    %334 = vmatpush2.msra.mxu0 0.0
    %335 = vmatprep.subr.mxu0 0.0
    %336 = vmatpush2.msra.mxu0 0.0
    %337 = vmatprep.subr.mxu0 0.0
    %338 = vmatpush2.msra.mxu0 0.0
    %339 = vmatprep.subr.mxu0 0.0
    %340 = vmatpush2.msra.mxu0 0.0
    %341 = vmatprep.subr.mxu0 0.0
    %342 = vmatpush2.msra.mxu0 0.0
    %343 = vmatprep.subr.mxu0 0.0
    %344 = vmatpush2.msra.mxu0 0.0
    %345 = vmatprep.mubr.f32.mxu0 0.0
    %346 = vmatmul.mubr.f32.gmra.mxu0 %v276
    %v347 = vpop.f32.mrf.mxu0
    %v348 = vadd.f32 0.0, %v347
    %v349 = vpop.f32.mrf.mxu0
    %350 = vmatprep.mubr.f32.mxu0 0.0
    %351 = vmatmul.mubr.f32.gmra.mxu0 %v279
    %v352 = vpop.f32.mrf.mxu0
    %v353 = vadd.f32 0.0, %v352
    %v354 = vpop.f32.mrf.mxu0
    %355 = vdwg.mxu0
    %vm356 = vcmask 31744
    %v357 = vsel %vm356, %v348, -inf
    %v358 = vrot.slane %v357, 4
    %v359 = vmax.f32 %v357, %v358
    %v360 = vrot.slane %v359, 2
    %v361 = vmax.f32 %v359, %v360
    %v362 = vrot.slane %v361, 1
    %v363 = vmax.f32 %v361, %v362
    %v364 = vsel %vm356, %v353, -inf
    %v365 = vrot.slane %v364, 4
    %v366 = vmax.f32 %v364, %v365
    %v367 = vrot.slane %v366, 2
    %v368 = vmax.f32 %v366, %v367
    %v369 = vrot.slane %v368, 1
    %v370 = vmax.f32 %v368, %v369
    %v371 = vsub.f32 %v348, %v363
    %v372 = vsub.f32 %v353, %v370
    %v373 = vmul.f32 %v371, 1.442695
    %v374 = vpow.pop %v373
    %v375 = vmul.f32 %v372, 1.442695
    %v376 = vpow.pop %v375
    %v377 = vsel %vm356, %v374, 0.0
    %v378 = vrot.slane %v377, 4
    %v379 = vadd.f32 %v377, %v378
    %v380 = vrot.slane %v379, 2
    %v381 = vadd.f32 %v379, %v380
    %v382 = vrot.slane %v381, 1
    %v383 = vadd.f32 %v381, %v382
    %v384 = vsel %vm356, %v376, 0.0
    %v385 = vrot.slane %v384, 4
    %v386 = vadd.f32 %v384, %v385
    %v387 = vrot.slane %v386, 2
    %v388 = vadd.f32 %v386, %v387
    %v389 = vrot.slane %v388, 1
    %v390 = vadd.f32 %v388, %v389
    %v391 = vrcp.pop %v383
    %v392 = vmul.f32 1.0, %v391
    %v393 = vrcp.pop %v390
    %v394 = vmul.f32 1.0, %v393
    %v395 = vmul.f32 %v374, %v392
    %v396 = vmul.f32 %v376, %v394
    %v397 = vld [vmem:[%s6] sm:$0xf]
    %v399 = vsel %vm356, %v395, 0
    %v402 = vsel %vm356, %v396, 0
    %vm404 = vcmask 1043456
    %v406 = vsel %vm404, %v397, 0
    %408 = vmatprep.subr.mxu0 0.0
    %409 = vmatpush1.msra.mxu0 0.0
    %410 = vmatprep.subr.mxu0 0.0
    %411 = vmatpush1.msra.mxu0 0.0
    %412 = vmatprep.subr.mxu0 0.0
    %413 = vmatpush1.msra.mxu0 0.0
    %414 = vmatprep.subr.mxu0 0.0
    %415 = vmatpush1.msra.mxu0 0.0
    %416 = vmatprep.subr.mxu0 0.0
    %417 = vmatpush1.msra.mxu0 0.0
    %418 = vmatprep.subr.mxu0 0.0
    %419 = vmatpush1.msra.mxu0 0.0
    %420 = vmatprep.subr.mxu0 0.0
    %421 = vmatpush1.msra.mxu0 0.0
    %422 = vmatprep.subr.mxu0 0.0
    %423 = vmatpush1.msra.mxu0 0.0
    %424 = vmatprep.subr.mxu0 0.0
    %425 = vmatpush1.msra.mxu0 0.0
    %426 = vmatprep.subr.mxu0 0.0
    %427 = vmatpush1.msra.mxu0 0.0
    %428 = vmatprep.subr.mxu0 0.0
    %429 = vmatpush1.msra.mxu0 0.0
    %430 = vmatprep.subr.mxu0 0.0
    %431 = vmatpush1.msra.mxu0 0.0
    %432 = vmatprep.subr.mxu0 0.0
    %433 = vmatpush1.msra.mxu0 0.0
    %434 = vmatprep.subr.mxu0 0.0
    %435 = vmatpush1.msra.mxu0 0.0
    %436 = vmatprep.subr.mxu0 0.0
    %437 = vmatpush1.msra.mxu0 0.0
    %438 = vmatprep.subr.mxu0 0.0
    %439 = vmatpush1.msra.mxu0 %v406
    %440 = vmatprep.subr.mxu0 0.0
    %441 = vmatpush2.msra.mxu0 0.0
    %442 = vmatprep.subr.mxu0 0.0
    %443 = vmatpush2.msra.mxu0 0.0
    %444 = vmatprep.subr.mxu0 0.0
    %445 = vmatpush2.msra.mxu0 0.0
    %446 = vmatprep.subr.mxu0 0.0
    %447 = vmatpush2.msra.mxu0 0.0
    %448 = vmatprep.subr.mxu0 0.0
    %449 = vmatpush2.msra.mxu0 0.0
    %450 = vmatprep.subr.mxu0 0.0
    %451 = vmatpush2.msra.mxu0 0.0
    %452 = vmatprep.subr.mxu0 0.0
    %453 = vmatpush2.msra.mxu0 0.0
    %454 = vmatprep.subr.mxu0 0.0
    %455 = vmatpush2.msra.mxu0 0.0
    %456 = vmatprep.subr.mxu0 0.0
    %457 = vmatpush2.msra.mxu0 0.0
    %458 = vmatprep.subr.mxu0 0.0
    %459 = vmatpush2.msra.mxu0 0.0
    %460 = vmatprep.subr.mxu0 0.0
    %461 = vmatpush2.msra.mxu0 0.0
    %462 = vmatprep.subr.mxu0 0.0
    %463 = vmatpush2.msra.mxu0 0.0
    %464 = vmatprep.subr.mxu0 0.0
    %465 = vmatpush2.msra.mxu0 0.0
    %466 = vmatprep.subr.mxu0 0.0
    %467 = vmatpush2.msra.mxu0 0.0
    %468 = vmatprep.subr.mxu0 0.0
    %469 = vmatpush2.msra.mxu0 0.0
    %470 = vmatprep.subr.mxu0 0.0
    %471 = vmatpush2.msra.mxu0 0.0
    %472 = vmatprep.mubr.f32.mxu0 0.0
    %473 = vmatmul.mubr.f32.gmra.mxu0 %v399
    %v474 = vpop.f32.mrf.mxu0
    %v475 = vadd.f32 0.0, %v474
    %v476 = vpop.f32.mrf.mxu0
    %477 = vmatprep.mubr.f32.mxu0 0.0
    %478 = vmatmul.mubr.f32.gmra.mxu0 %v402
    %v479 = vpop.f32.mrf.mxu0
    %v480 = vadd.f32 0.0, %v479
    %v481 = vpop.f32.mrf.mxu0
    %482 = vdwg.mxu0
    %v483 = vmul.f32 %v475, %v227
    %v484 = vmul.f32 %v480, %v232
    %v485 = vsel %vm74, %v483, 0.0
    %v486 = vrot.slane %v485, 4
    %v487 = vadd.f32 %v485, %v486
    %v488 = vrot.slane %v487, 2
    %v489 = vadd.f32 %v487, %v488
    %v490 = vrot.slane %v489, 1
    %v491 = vadd.f32 %v489, %v490
    %v492 = vsel %vm74, %v484, 0.0
    %v493 = vrot.slane %v492, 4
    %v494 = vadd.f32 %v492, %v493
    %v495 = vrot.slane %v494, 2
    %v496 = vadd.f32 %v494, %v495
    %v497 = vrot.slane %v496, 1
    %v498 = vadd.f32 %v496, %v497
    %v499 = vld [vmem:[#allocation7] sm:$0xff]
    %v500 = vld [vmem:[#allocation7 + $0x8] sm:$0xff]
    %v501 = vld [vmem:[#allocation7 + $0x10] sm:$0xff]
    %v502 = vld [vmem:[#allocation7 + $0x18] sm:$0xff]
    %vm505 = vcmask 1041409
    %v506 = vsel %vm505, %v498, %v491
    %v507 = vsel %vm74, %v506, 0
    %509 = vmatprep.subr.mxu0 0.0
    %510 = vmatpush1.msra.mxu0 0.0
    %511 = vmatprep.subr.mxu0 0.0
    %512 = vmatpush1.msra.mxu0 0.0
    %513 = vmatprep.subr.mxu0 0.0
    %514 = vmatpush1.msra.mxu0 0.0
    %515 = vmatprep.subr.mxu0 0.0
    %516 = vmatpush1.msra.mxu0 0.0
    %517 = vmatprep.subr.mxu0 0.0
    %518 = vmatpush1.msra.mxu0 0.0
    %519 = vmatprep.subr.mxu0 0.0
    %520 = vmatpush1.msra.mxu0 0.0
    %521 = vmatprep.subr.mxu0 0.0
    %522 = vmatpush1.msra.mxu0 0.0
    %523 = vmatprep.subr.mxu0 0.0
    %524 = vmatpush1.msra.mxu0 0.0
    %525 = vmatprep.subr.mxu0 0.0
    %526 = vmatpush1.msra.mxu0 0.0
    %527 = vmatprep.subr.mxu0 0.0
    %528 = vmatpush1.msra.mxu0 0.0
    %529 = vmatprep.subr.mxu0 0.0
    %530 = vmatpush1.msra.mxu0 0.0
    %531 = vmatprep.subr.mxu0 0.0
    %532 = vmatpush1.msra.mxu0 0.0
    %533 = vmatprep.subr.mxu0 0.0
    %534 = vmatpush1.msra.mxu0 %v502
    %535 = vmatprep.subr.mxu0 0.0
    %536 = vmatpush1.msra.mxu0 %v501
    %537 = vmatprep.subr.mxu0 0.0
    %538 = vmatpush1.msra.mxu0 %v500
    %539 = vmatprep.subr.mxu0 0.0
    %540 = vmatpush1.msra.mxu0 %v499
    %541 = vmatprep.subr.mxu0 0.0
    %542 = vmatpush2.msra.mxu0 0.0
    %543 = vmatprep.subr.mxu0 0.0
    %544 = vmatpush2.msra.mxu0 0.0
    %545 = vmatprep.subr.mxu0 0.0
    %546 = vmatpush2.msra.mxu0 0.0
    %547 = vmatprep.subr.mxu0 0.0
    %548 = vmatpush2.msra.mxu0 0.0
    %549 = vmatprep.subr.mxu0 0.0
    %550 = vmatpush2.msra.mxu0 0.0
    %551 = vmatprep.subr.mxu0 0.0
    %552 = vmatpush2.msra.mxu0 0.0
    %553 = vmatprep.subr.mxu0 0.0
    %554 = vmatpush2.msra.mxu0 0.0
    %555 = vmatprep.subr.mxu0 0.0
    %556 = vmatpush2.msra.mxu0 0.0
    %557 = vmatprep.subr.mxu0 0.0
    %558 = vmatpush2.msra.mxu0 0.0
    %559 = vmatprep.subr.mxu0 0.0
    %560 = vmatpush2.msra.mxu0 0.0
    %561 = vmatprep.subr.mxu0 0.0
    %562 = vmatpush2.msra.mxu0 0.0
    %563 = vmatprep.subr.mxu0 0.0
    %564 = vmatpush2.msra.mxu0 0.0
    %565 = vmatprep.subr.mxu0 0.0
    %566 = vmatpush2.msra.mxu0 0.0
    %567 = vmatprep.subr.mxu0 0.0
    %568 = vmatpush2.msra.mxu0 0.0
    %569 = vmatprep.subr.mxu0 0.0
    %570 = vmatpush2.msra.mxu0 0.0
    %571 = vmatprep.subr.mxu0 0.0
    %572 = vmatpush2.msra.mxu0 0.0
    %573 = vmatprep.mubr.f32.mxu0 0.0
    %574 = vmatmul.mubr.f32.gmra.mxu0 %v507
    %v575 = vpop.f32.mrf.mxu0
    %v576 = vadd.f32 0.0, %v575
    %v577 = vpop.f32.mrf.mxu0
    %578 = vdwg.mxu0
    %vm579 = vcmask 254976
    %580 = vst.msk [vmem:[#allocation8] sm:$0x3] %vm579, %v576
    // Predicated region
    $region42: #{tpu_custom_call.1} parent=1 // pred_check
      _
    $region43: #{tpu_custom_call.1} parent=1 // pred_check_branch
      %582 = sbr.rel (0) target = $region45
    $region44: #{tpu_custom_call.1} parent=1 // pred_region
      %s584 = ssub.s32 32, 32
      %585 = vsyncadd [#allocation4], %s584
      %s587 = sshll.u32 [#allocation8], 4
      %s588 = int_to_ptr.vmem [resolvable:$true] %s587
      %590 = dma.vmem_to_hbm [thread:$0]  %s588, 32, %s7, [#allocation4]
    $region45: #{tpu_custom_call.1} parent=1 // pred_fallthru
      _
    // Predicated region
    $region46: #{tpu_custom_call.1} parent=1 // pred_check
      _
    $region47: #{tpu_custom_call.1} parent=1 // pred_check_branch
      %592 = sbr.rel (0) target = $region49
    $region48: #{tpu_custom_call.1} parent=1 // pred_region
      %593 = dma.done [#allocation4], 32
    $region49: #{tpu_custom_call.1} parent=1 // pred_fallthru
      _
    %594 = vsyncpa [#allocation3], 1
    %595 = vsyncpa [#allocation6], 1
    %596 = vsyncpa [#allocation4], 1

// kernel: tpu_custom_call.1
$region0: #{tpu_custom_call.1}
  #allocation0 [shape = 'u32[]', space=smem, size = 0x4, offset = 0x4, fixed_abs, tag = 'smem constant byte address 0x4 - core index']
  #allocation1 [shape = 'u32[144,128]{1,0:T(1,128)}', space=vmem, size = 0x12000, scoped, tag = 'internal scratch']
  %s0 = inlined_call_operand.hbm [shape: f32[2,8,32], index: 0, kind: input, shape index: {}]
  %s1 = inlined_call_operand.vmem [shape: f32[2,32], index: 1, kind: input, shape index: {}]
  %s2 = inlined_call_operand.vmem [shape: f32[32,32], index: 2, kind: input, shape index: {}]
  %s3 = inlined_call_operand.hbm [shape: f32[32,32], index: 3, kind: input, shape index: {}]
  %s4 = inlined_call_operand.hbm [shape: f32[32,32], index: 4, kind: input, shape index: {}]
  %s5 = inlined_call_operand.vmem [shape: f32[32,4], index: 5, kind: input, shape index: {}]
  %s6 = inlined_call_operand.vmem [shape: f32[4,32], index: 6, kind: input, shape index: {}]
  %s7 = inlined_call_operand.hbm [shape: f32[2,32], index: 7, kind: output, shape index: {}]
  %s8 = sld [smem:[#allocation0]]
  $region50: #{tpu_custom_call.1} parent=0
    _
  %s10 = ssub.s32 1, %s8
  %s11 = scalar_select 0, %s10, %s8
  $region1: #{tpu_custom_call.1} parent=0
    #allocation2 [shape = 'u8[8192]{0}', space=vmem, size = 0x2000, scoped, tag = 'input window, operand 0, single buffered']
    #allocation3 [shape = 's32[1]{0}', space=sflag, size = 0x4, scoped, tag = 'scoped memory for tpu_custom_call.1']
    #allocation4 [shape = 's32[1]{0}', space=sflag, size = 0x4, scoped, tag = 'scoped memory for tpu_custom_call.1']
    #allocation5 [shape = 'u8[16384]{0}', space=vmem, size = 0x4000, scoped, tag = 'input window, operand 3, single buffered']
    #allocation6 [shape = 's32[1]{0}', space=sflag, size = 0x4, scoped, tag = 'scoped memory for tpu_custom_call.1']
    #allocation7 [shape = 'u8[16384]{0}', space=vmem, size = 0x4000, scoped, tag = 'input window, operand 4, single buffered']
    #allocation8 [shape = 'u8[1024]{0}', space=vmem, size = 0x400, scoped, tag = 'output window, operand 0, single buffered']
    %12 = vsyncpa [#allocation3], 0
    %13 = vsyncpa [#allocation6], 0
    %14 = vsyncpa [#allocation4], 0
    // Predicated region
    $region2: #{tpu_custom_call.1} parent=1 // pred_check
      _
    $region3: #{tpu_custom_call.1} parent=1 // pred_check_branch
      %16 = sbr.rel (0) target = $region5
    $region4: #{tpu_custom_call.1} parent=1 // pred_region
      %s18 = ssub.s32 256, 256
      %19 = vsyncadd [#allocation3], %s18
      %s20 = sshll.u32 [#allocation2], 4
      %s21 = int_to_ptr.vmem [resolvable:$true] %s20
      %26 = dma.hbm_to_vmem [thread:$0]  %s0, 256, %s21, [#allocation3], 128, 128, 8
    $region5: #{tpu_custom_call.1} parent=1 // pred_fallthru
      _
    // Predicated region
    $region6: #{tpu_custom_call.1} parent=1 // pred_check
      _
    $region7: #{tpu_custom_call.1} parent=1 // pred_check_branch
      %28 = sbr.rel (0) target = $region9
    $region8: #{tpu_custom_call.1} parent=1 // pred_region
      _
    $region9: #{tpu_custom_call.1} parent=1 // pred_fallthru
      _
    // Predicated region
    $region10: #{tpu_custom_call.1} parent=1 // pred_check
      _
    $region11: #{tpu_custom_call.1} parent=1 // pred_check_branch
      %30 = sbr.rel (0) target = $region13
    $region12: #{tpu_custom_call.1} parent=1 // pred_region
      _
    $region13: #{tpu_custom_call.1} parent=1 // pred_fallthru
      _
    // Predicated region
    $region14: #{tpu_custom_call.1} parent=1 // pred_check
      _
    $region15: #{tpu_custom_call.1} parent=1 // pred_check_branch
      %32 = sbr.rel (0) target = $region17
    $region16: #{tpu_custom_call.1} parent=1 // pred_region
      %s34 = ssub.s32 512, 512
      %35 = vsyncadd [#allocation6], %s34
      %s36 = sshll.u32 [#allocation5], 4
      %s37 = int_to_ptr.vmem [resolvable:$true] %s36
      %42 = dma.hbm_to_vmem [thread:$0]  %s3, 512, %s37, [#allocation6], 128, 128, 8
    $region17: #{tpu_custom_call.1} parent=1 // pred_fallthru
      _
    // Predicated region
    $region18: #{tpu_custom_call.1} parent=1 // pred_check
      _
    $region19: #{tpu_custom_call.1} parent=1 // pred_check_branch
      %44 = sbr.rel (0) target = $region21
    $region20: #{tpu_custom_call.1} parent=1 // pred_region
      %s46 = ssub.s32 512, 512
      %47 = vsyncadd [#allocation6], %s46
      %s48 = sshll.u32 [#allocation7], 4
      %s49 = int_to_ptr.vmem [resolvable:$true] %s48
      %54 = dma.hbm_to_vmem [thread:$0]  %s4, 512, %s49, [#allocation6], 128, 128, 8
    $region21: #{tpu_custom_call.1} parent=1 // pred_fallthru
      _
    // Predicated region
    $region22: #{tpu_custom_call.1} parent=1 // pred_check
      _
    $region23: #{tpu_custom_call.1} parent=1 // pred_check_branch
      %56 = sbr.rel (0) target = $region25
    $region24: #{tpu_custom_call.1} parent=1 // pred_region
      _
    $region25: #{tpu_custom_call.1} parent=1 // pred_fallthru
      _
    // Predicated region
    $region26: #{tpu_custom_call.1} parent=1 // pred_check
      _
    $region27: #{tpu_custom_call.1} parent=1 // pred_check_branch
      %58 = sbr.rel (0) target = $region29
    $region28: #{tpu_custom_call.1} parent=1 // pred_region
      _
    $region29: #{tpu_custom_call.1} parent=1 // pred_fallthru
      _
    // Predicated region
    $region30: #{tpu_custom_call.1} parent=1 // pred_check
      _
    $region31: #{tpu_custom_call.1} parent=1 // pred_check_branch
      %60 = sbr.rel (0) target = $region33
    $region32: #{tpu_custom_call.1} parent=1 // pred_region
      %61 = dma.done [#allocation3], 256
    $region33: #{tpu_custom_call.1} parent=1 // pred_fallthru
      _
    // Predicated region
    $region34: #{tpu_custom_call.1} parent=1 // pred_check
      _
    $region35: #{tpu_custom_call.1} parent=1 // pred_check_branch
      %63 = sbr.rel (0) target = $region37
    $region36: #{tpu_custom_call.1} parent=1 // pred_region
      %64 = dma.done [#allocation6], 512
    $region37: #{tpu_custom_call.1} parent=1 // pred_fallthru
      _
    // Predicated region
    $region38: #{tpu_custom_call.1} parent=1 // pred_check
      _
    $region39: #{tpu_custom_call.1} parent=1 // pred_check_branch
      %66 = sbr.rel (0) target = $region41
    $region40: #{tpu_custom_call.1} parent=1 // pred_region
      %67 = dma.done [#allocation6], 512
    $region41: #{tpu_custom_call.1} parent=1 // pred_fallthru
      _
    %v68 = vld [vmem:[#allocation2] sm:$0xff]
    %v69 = vld [vmem:[#allocation2 + $0x8] sm:$0xff]
    %v70 = vld [vmem:[%s2] sm:$0xff]
    %v71 = vld [vmem:[%s2 + $0x8] sm:$0xff]
    %v72 = vld [vmem:[%s2 + $0x10] sm:$0xff]
    %v73 = vld [vmem:[%s2 + $0x18] sm:$0xff]
    %vm74 = vcmask 261120
    %v76 = vsel %vm74, %v68, 0
    %v79 = vsel %vm74, %v69, 0
    %81 = vmatprep.subr.mxu0 0.0
    %82 = vmatpush1.msra.mxu0 0.0
    %83 = vmatprep.subr.mxu0 0.0
    %84 = vmatpush1.msra.mxu0 0.0
    %85 = vmatprep.subr.mxu0 0.0
    %86 = vmatpush1.msra.mxu0 0.0
    %87 = vmatprep.subr.mxu0 0.0
    %88 = vmatpush1.msra.mxu0 0.0
    %89 = vmatprep.subr.mxu0 0.0
    %90 = vmatpush1.msra.mxu0 0.0
    %91 = vmatprep.subr.mxu0 0.0
    %92 = vmatpush1.msra.mxu0 0.0
    %93 = vmatprep.subr.mxu0 0.0
    %94 = vmatpush1.msra.mxu0 0.0
    %95 = vmatprep.subr.mxu0 0.0
    %96 = vmatpush1.msra.mxu0 0.0
    %97 = vmatprep.subr.mxu0 0.0
    %98 = vmatpush1.msra.mxu0 0.0
    %99 = vmatprep.subr.mxu0 0.0
    %100 = vmatpush1.msra.mxu0 0.0
    %101 = vmatprep.subr.mxu0 0.0
    %102 = vmatpush1.msra.mxu0 0.0
    %103 = vmatprep.subr.mxu0 0.0
    %104 = vmatpush1.msra.mxu0 0.0
    %105 = vmatprep.subr.mxu0 0.0
    %106 = vmatpush1.msra.mxu0 %v73
    %107 = vmatprep.subr.mxu0 0.0
    %108 = vmatpush1.msra.mxu0 %v72
    %109 = vmatprep.subr.mxu0 0.0
    %110 = vmatpush1.msra.mxu0 %v71
    %111 = vmatprep.subr.mxu0 0.0
    %112 = vmatpush1.msra.mxu0 %v70
    %113 = vmatprep.subr.mxu0 0.0
    %114 = vmatpush2.msra.mxu0 0.0
    %115 = vmatprep.subr.mxu0 0.0
    %116 = vmatpush2.msra.mxu0 0.0
    %117 = vmatprep.subr.mxu0 0.0
    %118 = vmatpush2.msra.mxu0 0.0
    %119 = vmatprep.subr.mxu0 0.0
    %120 = vmatpush2.msra.mxu0 0.0
    %121 = vmatprep.subr.mxu0 0.0
    %122 = vmatpush2.msra.mxu0 0.0
    %123 = vmatprep.subr.mxu0 0.0
    %124 = vmatpush2.msra.mxu0 0.0
    %125 = vmatprep.subr.mxu0 0.0
    %126 = vmatpush2.msra.mxu0 0.0
    %127 = vmatprep.subr.mxu0 0.0
    %128 = vmatpush2.msra.mxu0 0.0
    %129 = vmatprep.subr.mxu0 0.0
    %130 = vmatpush2.msra.mxu0 0.0
    %131 = vmatprep.subr.mxu0 0.0
    %132 = vmatpush2.msra.mxu0 0.0
    %133 = vmatprep.subr.mxu0 0.0
    %134 = vmatpush2.msra.mxu0 0.0
    %135 = vmatprep.subr.mxu0 0.0
    %136 = vmatpush2.msra.mxu0 0.0
    %137 = vmatprep.subr.mxu0 0.0
    %138 = vmatpush2.msra.mxu0 0.0
    %139 = vmatprep.subr.mxu0 0.0
    %140 = vmatpush2.msra.mxu0 0.0
    %141 = vmatprep.subr.mxu0 0.0
    %142 = vmatpush2.msra.mxu0 0.0
    %143 = vmatprep.subr.mxu0 0.0
    %144 = vmatpush2.msra.mxu0 0.0
    %145 = vmatprep.mubr.f32.mxu0 0.0
    %146 = vmatmul.mubr.f32.gmra.mxu0 %v76
    %v147 = vpop.f32.mrf.mxu0
    %v148 = vadd.f32 0.0, %v147
    %v149 = vpop.f32.mrf.mxu0
    %150 = vmatprep.mubr.f32.mxu0 0.0
    %151 = vmatmul.mubr.f32.gmra.mxu0 %v79
    %v152 = vpop.f32.mrf.mxu0
    %v153 = vadd.f32 0.0, %v152
    %v154 = vpop.f32.mrf.mxu0
    %155 = vdwg.mxu0
    %v156 = vld [vmem:[#allocation5] sm:$0xff]
    %v157 = vld [vmem:[#allocation5 + $0x8] sm:$0xff]
    %v158 = vld [vmem:[#allocation5 + $0x10] sm:$0xff]
    %v159 = vld [vmem:[#allocation5 + $0x18] sm:$0xff]
    %160 = vmatprep.subr.mxu0 0.0
    %161 = vmatpush1.msra.mxu0 0.0
    %162 = vmatprep.subr.mxu0 0.0
    %163 = vmatpush1.msra.mxu0 0.0
    %164 = vmatprep.subr.mxu0 0.0
    %165 = vmatpush1.msra.mxu0 0.0
    %166 = vmatprep.subr.mxu0 0.0
    %167 = vmatpush1.msra.mxu0 0.0
    %168 = vmatprep.subr.mxu0 0.0
    %169 = vmatpush1.msra.mxu0 0.0
    %170 = vmatprep.subr.mxu0 0.0
    %171 = vmatpush1.msra.mxu0 0.0
    %172 = vmatprep.subr.mxu0 0.0
    %173 = vmatpush1.msra.mxu0 0.0
    %174 = vmatprep.subr.mxu0 0.0
    %175 = vmatpush1.msra.mxu0 0.0
    %176 = vmatprep.subr.mxu0 0.0
    %177 = vmatpush1.msra.mxu0 0.0
    %178 = vmatprep.subr.mxu0 0.0
    %179 = vmatpush1.msra.mxu0 0.0
    %180 = vmatprep.subr.mxu0 0.0
    %181 = vmatpush1.msra.mxu0 0.0
    %182 = vmatprep.subr.mxu0 0.0
    %183 = vmatpush1.msra.mxu0 0.0
    %184 = vmatprep.subr.mxu0 0.0
    %185 = vmatpush1.msra.mxu0 %v159
    %186 = vmatprep.subr.mxu0 0.0
    %187 = vmatpush1.msra.mxu0 %v158
    %188 = vmatprep.subr.mxu0 0.0
    %189 = vmatpush1.msra.mxu0 %v157
    %190 = vmatprep.subr.mxu0 0.0
    %191 = vmatpush1.msra.mxu0 %v156
    %192 = vmatprep.subr.mxu0 0.0
    %193 = vmatpush2.msra.mxu0 0.0
    %194 = vmatprep.subr.mxu0 0.0
    %195 = vmatpush2.msra.mxu0 0.0
    %196 = vmatprep.subr.mxu0 0.0
    %197 = vmatpush2.msra.mxu0 0.0
    %198 = vmatprep.subr.mxu0 0.0
    %199 = vmatpush2.msra.mxu0 0.0
    %200 = vmatprep.subr.mxu0 0.0
    %201 = vmatpush2.msra.mxu0 0.0
    %202 = vmatprep.subr.mxu0 0.0
    %203 = vmatpush2.msra.mxu0 0.0
    %204 = vmatprep.subr.mxu0 0.0
    %205 = vmatpush2.msra.mxu0 0.0
    %206 = vmatprep.subr.mxu0 0.0
    %207 = vmatpush2.msra.mxu0 0.0
    %208 = vmatprep.subr.mxu0 0.0
    %209 = vmatpush2.msra.mxu0 0.0
    %210 = vmatprep.subr.mxu0 0.0
    %211 = vmatpush2.msra.mxu0 0.0
    %212 = vmatprep.subr.mxu0 0.0
    %213 = vmatpush2.msra.mxu0 0.0
    %214 = vmatprep.subr.mxu0 0.0
    %215 = vmatpush2.msra.mxu0 0.0
    %216 = vmatprep.subr.mxu0 0.0
    %217 = vmatpush2.msra.mxu0 0.0
    %218 = vmatprep.subr.mxu0 0.0
    %219 = vmatpush2.msra.mxu0 0.0
    %220 = vmatprep.subr.mxu0 0.0
    %221 = vmatpush2.msra.mxu0 0.0
    %222 = vmatprep.subr.mxu0 0.0
    %223 = vmatpush2.msra.mxu0 0.0
    %224 = vmatprep.mubr.f32.mxu0 0.0
    %225 = vmatmul.mubr.f32.gmra.mxu0 %v76
    %v226 = vpop.f32.mrf.mxu0
    %v227 = vadd.f32 0.0, %v226
    %v228 = vpop.f32.mrf.mxu0
    %229 = vmatprep.mubr.f32.mxu0 0.0
    %230 = vmatmul.mubr.f32.gmra.mxu0 %v79
    %v231 = vpop.f32.mrf.mxu0
    %v232 = vadd.f32 0.0, %v231
    %v233 = vpop.f32.mrf.mxu0
    %234 = vdwg.mxu0
    %v235 = vld [vmem:[%s1] sm:$0x3]
    %v238 = vunpack.c.l.s4 1966171168
    %v239 = vunpack.c.0.s8 %v238
    %v240 = vlaneseq
    %v241 = vshrl.u32 %v240, 7
    %v242 = vsub.s32 %v239, %v241
    %v243 = vrot.slane %v235, %v242
    %v244 = vcombine.high %v243, %v243
    %v246 = vunpack.c.l.s4 1966171168
    %v247 = vunpack.c.0.s8 %v246
    %v248 = vlaneseq
    %v249 = vshrl.u32 %v248, 7
    %v250 = vsub.s32 %v247, %v249
    %v251 = vrot.slane %v243, %v250
    %v253 = vunpack.c.l.s4 1966171168
    %v254 = vunpack.c.0.s8 %v253
    %v255 = vlaneseq
    %v256 = vshrl.u32 %v255, 7
    %v257 = vsub.s32 %v254, %v256
    %v258 = vrot.slane %v244, %v257
    %v259 = vlaneseq
    %v260 = vshrl.u32 %v259, 7
    %v261 = vsub.s32 0, %v260
    %v262 = vrot.slane %v251, %v261
    %v263 = vlaneseq
    %v264 = vshrl.u32 %v263, 7
    %v265 = vsub.s32 0, %v264
    %v266 = vrot.slane %v258, %v265
    %v269 = vmul.f32 %v148, %v262
    %v270 = vmul.f32 %v153, %v266
    %v271 = vld [vmem:[%s5] sm:$0xff]
    %v272 = vld [vmem:[%s5 + $0x8] sm:$0xff]
    %v273 = vld [vmem:[%s5 + $0x10] sm:$0xff]
    %v274 = vld [vmem:[%s5 + $0x18] sm:$0xff]
    %v276 = vsel %vm74, %v269, 0
    %v279 = vsel %vm74, %v270, 0
    %281 = vmatprep.subr.mxu0 0.0
    %282 = vmatpush1.msra.mxu0 0.0
    %283 = vmatprep.subr.mxu0 0.0
    %284 = vmatpush1.msra.mxu0 0.0
    %285 = vmatprep.subr.mxu0 0.0
    %286 = vmatpush1.msra.mxu0 0.0
    %287 = vmatprep.subr.mxu0 0.0
    %288 = vmatpush1.msra.mxu0 0.0
    %289 = vmatprep.subr.mxu0 0.0
    %290 = vmatpush1.msra.mxu0 0.0
    %291 = vmatprep.subr.mxu0 0.0
    %292 = vmatpush1.msra.mxu0 0.0
    %293 = vmatprep.subr.mxu0 0.0
    %294 = vmatpush1.msra.mxu0 0.0
    %295 = vmatprep.subr.mxu0 0.0
    %296 = vmatpush1.msra.mxu0 0.0
    %297 = vmatprep.subr.mxu0 0.0
    %298 = vmatpush1.msra.mxu0 0.0
    %299 = vmatprep.subr.mxu0 0.0
    %300 = vmatpush1.msra.mxu0 0.0
    %301 = vmatprep.subr.mxu0 0.0
    %302 = vmatpush1.msra.mxu0 0.0
    %303 = vmatprep.subr.mxu0 0.0
    %304 = vmatpush1.msra.mxu0 0.0
    %305 = vmatprep.subr.mxu0 0.0
    %306 = vmatpush1.msra.mxu0 %v274
    %307 = vmatprep.subr.mxu0 0.0
    %308 = vmatpush1.msra.mxu0 %v273
    %309 = vmatprep.subr.mxu0 0.0
    %310 = vmatpush1.msra.mxu0 %v272
    %311 = vmatprep.subr.mxu0 0.0
    %312 = vmatpush1.msra.mxu0 %v271
    %313 = vmatprep.subr.mxu0 0.0
    %314 = vmatpush2.msra.mxu0 0.0
    %315 = vmatprep.subr.mxu0 0.0
    %316 = vmatpush2.msra.mxu0 0.0
    %317 = vmatprep.subr.mxu0 0.0
    %318 = vmatpush2.msra.mxu0 0.0
    %319 = vmatprep.subr.mxu0 0.0
    %320 = vmatpush2.msra.mxu0 0.0
    %321 = vmatprep.subr.mxu0 0.0
    %322 = vmatpush2.msra.mxu0 0.0
    %323 = vmatprep.subr.mxu0 0.0
    %324 = vmatpush2.msra.mxu0 0.0
    %325 = vmatprep.subr.mxu0 0.0
    %326 = vmatpush2.msra.mxu0 0.0
    %327 = vmatprep.subr.mxu0 0.0
    %328 = vmatpush2.msra.mxu0 0.0
    %329 = vmatprep.subr.mxu0 0.0
    %330 = vmatpush2.msra.mxu0 0.0
    %331 = vmatprep.subr.mxu0 0.0
    %332 = vmatpush2.msra.mxu0 0.0
    %333 = vmatprep.subr.mxu0 0.0
    %334 = vmatpush2.msra.mxu0 0.0
    %335 = vmatprep.subr.mxu0 0.0
    %336 = vmatpush2.msra.mxu0 0.0
    %337 = vmatprep.subr.mxu0 0.0
    %338 = vmatpush2.msra.mxu0 0.0
    %339 = vmatprep.subr.mxu0 0.0
    %340 = vmatpush2.msra.mxu0 0.0
    %341 = vmatprep.subr.mxu0 0.0
    %342 = vmatpush2.msra.mxu0 0.0
    %343 = vmatprep.subr.mxu0 0.0
    %344 = vmatpush2.msra.mxu0 0.0
    %345 = vmatprep.mubr.f32.mxu0 0.0
    %346 = vmatmul.mubr.f32.gmra.mxu0 %v276
    %v347 = vpop.f32.mrf.mxu0
    %v348 = vadd.f32 0.0, %v347
    %v349 = vpop.f32.mrf.mxu0
    %350 = vmatprep.mubr.f32.mxu0 0.0
    %351 = vmatmul.mubr.f32.gmra.mxu0 %v279
    %v352 = vpop.f32.mrf.mxu0
    %v353 = vadd.f32 0.0, %v352
    %v354 = vpop.f32.mrf.mxu0
    %355 = vdwg.mxu0
    %vm356 = vcmask 31744
    %v357 = vsel %vm356, %v348, -inf
    %v358 = vrot.slane %v357, 4
    %v359 = vmax.f32 %v357, %v358
    %v360 = vrot.slane %v359, 2
    %v361 = vmax.f32 %v359, %v360
    %v362 = vrot.slane %v361, 1
    %v363 = vmax.f32 %v361, %v362
    %v364 = vsel %vm356, %v353, -inf
    %v365 = vrot.slane %v364, 4
    %v366 = vmax.f32 %v364, %v365
    %v367 = vrot.slane %v366, 2
    %v368 = vmax.f32 %v366, %v367
    %v369 = vrot.slane %v368, 1
    %v370 = vmax.f32 %v368, %v369
    %v371 = vsub.f32 %v348, %v363
    %v372 = vsub.f32 %v353, %v370
    %v373 = vmul.f32 %v371, 1.442695
    %v374 = vpow.pop %v373
    %v375 = vmul.f32 %v372, 1.442695
    %v376 = vpow.pop %v375
    %v377 = vsel %vm356, %v374, 0.0
    %v378 = vrot.slane %v377, 4
    %v379 = vadd.f32 %v377, %v378
    %v380 = vrot.slane %v379, 2
    %v381 = vadd.f32 %v379, %v380
    %v382 = vrot.slane %v381, 1
    %v383 = vadd.f32 %v381, %v382
    %v384 = vsel %vm356, %v376, 0.0
    %v385 = vrot.slane %v384, 4
    %v386 = vadd.f32 %v384, %v385
    %v387 = vrot.slane %v386, 2
    %v388 = vadd.f32 %v386, %v387
    %v389 = vrot.slane %v388, 1
    %v390 = vadd.f32 %v388, %v389
    %v391 = vrcp.pop %v383
    %v392 = vmul.f32 1.0, %v391
    %v393 = vrcp.pop %v390
    %v394 = vmul.f32 1.0, %v393
    %v395 = vmul.f32 %v374, %v392
    %v396 = vmul.f32 %v376, %v394
    %v397 = vld [vmem:[%s6] sm:$0xf]
    %v399 = vsel %vm356, %v395, 0
    %v402 = vsel %vm356, %v396, 0
    %vm404 = vcmask 1043456
    %v406 = vsel %vm404, %v397, 0
    %408 = vmatprep.subr.mxu0 0.0
    %409 = vmatpush1.msra.mxu0 0.0
    %410 = vmatprep.subr.mxu0 0.0
    %411 = vmatpush1.msra.mxu0 0.0
    %412 = vmatprep.subr.mxu0 0.0
    %413 = vmatpush1.msra.mxu0 0.0
    %414 = vmatprep.subr.mxu0 0.0
    %415 = vmatpush1.msra.mxu0 0.0
    %416 = vmatprep.subr.mxu0 0.0
    %417 = vmatpush1.msra.mxu0 0.0
    %418 = vmatprep.subr.mxu0 0.0
    %419 = vmatpush1.msra.mxu0 0.0
    %420 = vmatprep.subr.mxu0 0.0
    %421 = vmatpush1.msra.mxu0 0.0
    %422 = vmatprep.subr.mxu0 0.0
    %423 = vmatpush1.msra.mxu0 0.0
    %424 = vmatprep.subr.mxu0 0.0
    %425 = vmatpush1.msra.mxu0 0.0
    %426 = vmatprep.subr.mxu0 0.0
    %427 = vmatpush1.msra.mxu0 0.0
    %428 = vmatprep.subr.mxu0 0.0
    %429 = vmatpush1.msra.mxu0 0.0
    %430 = vmatprep.subr.mxu0 0.0
    %431 = vmatpush1.msra.mxu0 0.0
    %432 = vmatprep.subr.mxu0 0.0
    %433 = vmatpush1.msra.mxu0 0.0
    %434 = vmatprep.subr.mxu0 0.0
    %435 = vmatpush1.msra.mxu0 0.0
    %436 = vmatprep.subr.mxu0 0.0
    %437 = vmatpush1.msra.mxu0 0.0
    %438 = vmatprep.subr.mxu0 0.0
    %439 = vmatpush1.msra.mxu0 %v406
    %440 = vmatprep.subr.mxu0 0.0
    %441 = vmatpush2.msra.mxu0 0.0
    %442 = vmatprep.subr.mxu0 0.0
    %443 = vmatpush2.msra.mxu0 0.0
    %444 = vmatprep.subr.mxu0 0.0
    %445 = vmatpush2.msra.mxu0 0.0
    %446 = vmatprep.subr.mxu0 0.0
    %447 = vmatpush2.msra.mxu0 0.0
    %448 = vmatprep.subr.mxu0 0.0
    %449 = vmatpush2.msra.mxu0 0.0
    %450 = vmatprep.subr.mxu0 0.0
    %451 = vmatpush2.msra.mxu0 0.0
    %452 = vmatprep.subr.mxu0 0.0
    %453 = vmatpush2.msra.mxu0 0.0
    %454 = vmatprep.subr.mxu0 0.0
    %455 = vmatpush2.msra.mxu0 0.0
    %456 = vmatprep.subr.mxu0 0.0
    %457 = vmatpush2.msra.mxu0 0.0
    %458 = vmatprep.subr.mxu0 0.0
    %459 = vmatpush2.msra.mxu0 0.0
    %460 = vmatprep.subr.mxu0 0.0
    %461 = vmatpush2.msra.mxu0 0.0
    %462 = vmatprep.subr.mxu0 0.0
    %463 = vmatpush2.msra.mxu0 0.0
    %464 = vmatprep.subr.mxu0 0.0
    %465 = vmatpush2.msra.mxu0 0.0
    %466 = vmatprep.subr.mxu0 0.0
    %467 = vmatpush2.msra.mxu0 0.0
    %468 = vmatprep.subr.mxu0 0.0
    %469 = vmatpush2.msra.mxu0 0.0
    %470 = vmatprep.subr.mxu0 0.0
    %471 = vmatpush2.msra.mxu0 0.0
    %472 = vmatprep.mubr.f32.mxu0 0.0
    %473 = vmatmul.mubr.f32.gmra.mxu0 %v399
    %v474 = vpop.f32.mrf.mxu0
    %v475 = vadd.f32 0.0, %v474
    %v476 = vpop.f32.mrf.mxu0
    %477 = vmatprep.mubr.f32.mxu0 0.0
    %478 = vmatmul.mubr.f32.gmra.mxu0 %v402
    %v479 = vpop.f32.mrf.mxu0
    %v480 = vadd.f32 0.0, %v479
    %v481 = vpop.f32.mrf.mxu0
    %482 = vdwg.mxu0
    %v483 = vmul.f32 %v475, %v227
    %v484 = vmul.f32 %v480, %v232
    %v485 = vsel %vm74, %v483, 0.0
    %v486 = vrot.slane %v485, 4
    %v487 = vadd.f32 %v485, %v486
    %v488 = vrot.slane %v487, 2
    %v489 = vadd.f32 %v487, %v488
    %v490 = vrot.slane %v489, 1
    %v491 = vadd.f32 %v489, %v490
    %v492 = vsel %vm74, %v484, 0.0
    %v493 = vrot.slane %v492, 4
    %v494 = vadd.f32 %v492, %v493
    %v495 = vrot.slane %v494, 2
    %v496 = vadd.f32 %v494, %v495
    %v497 = vrot.slane %v496, 1
    %v498 = vadd.f32 %v496, %v497
    %v499 = vld [vmem:[#allocation7] sm:$0xff]
    %v500 = vld [vmem:[#allocation7 + $0x8] sm:$0xff]
    %v501 = vld [vmem:[#allocation7 + $0x10] sm:$0xff]
    %v502 = vld [vmem:[#allocation7 + $0x18] sm:$0xff]
    %vm505 = vcmask 1041409
    %v506 = vsel %vm505, %v498, %v491
    %v507 = vsel %vm74, %v506, 0
    %509 = vmatprep.subr.mxu0 0.0
    %510 = vmatpush1.msra.mxu0 0.0
    %511 = vmatprep.subr.mxu0 0.0
    %512 = vmatpush1.msra.mxu0 0.0
    %513 = vmatprep.subr.mxu0 0.0
    %514 = vmatpush1.msra.mxu0 0.0
    %515 = vmatprep.subr.mxu0 0.0
    %516 = vmatpush1.msra.mxu0 0.0
    %517 = vmatprep.subr.mxu0 0.0
    %518 = vmatpush1.msra.mxu0 0.0
    %519 = vmatprep.subr.mxu0 0.0
    %520 = vmatpush1.msra.mxu0 0.0
    %521 = vmatprep.subr.mxu0 0.0
    %522 = vmatpush1.msra.mxu0 0.0
    %523 = vmatprep.subr.mxu0 0.0
    %524 = vmatpush1.msra.mxu0 0.0
    %525 = vmatprep.subr.mxu0 0.0
    %526 = vmatpush1.msra.mxu0 0.0
    %527 = vmatprep.subr.mxu0 0.0
    %528 = vmatpush1.msra.mxu0 0.0
    %529 = vmatprep.subr.mxu0 0.0
    %530 = vmatpush1.msra.mxu0 0.0
    %531 = vmatprep.subr.mxu0 0.0
    %532 = vmatpush1.msra.mxu0 0.0
    %533 = vmatprep.subr.mxu0 0.0
    %534 = vmatpush1.msra.mxu0 %v502
    %535 = vmatprep.subr.mxu0 0.0
    %536 = vmatpush1.msra.mxu0 %v501
    %537 = vmatprep.subr.mxu0 0.0
    %538 = vmatpush1.msra.mxu0 %v500
    %539 = vmatprep.subr.mxu0 0.0
    %540 = vmatpush1.msra.mxu0 %v499
    %541 = vmatprep.subr.mxu0 0.0
    %542 = vmatpush2.msra.mxu0 0.0
    %543 = vmatprep.subr.mxu0 0.0
    %544 = vmatpush2.msra.mxu0 0.0
    %545 = vmatprep.subr.mxu0 0.0
    %546 = vmatpush2.msra.mxu0 0.0
    %547 = vmatprep.subr.mxu0 0.0
    %548 = vmatpush2.msra.mxu0 0.0
    %549 = vmatprep.subr.mxu0 0.0
    %550 = vmatpush2.msra.mxu0 0.0
    %551 = vmatprep.subr.mxu0 0.0
    %552 = vmatpush2.msra.mxu0 0.0
    %553 = vmatprep.subr.mxu0 0.0
    %554 = vmatpush2.msra.mxu0 0.0
    %555 = vmatprep.subr.mxu0 0.0
    %556 = vmatpush2.msra.mxu0 0.0
    %557 = vmatprep.subr.mxu0 0.0
    %558 = vmatpush2.msra.mxu0 0.0
    %559 = vmatprep.subr.mxu0 0.0
    %560 = vmatpush2.msra.mxu0 0.0
    %561 = vmatprep.subr.mxu0 0.0
    %562 = vmatpush2.msra.mxu0 0.0
    %563 = vmatprep.subr.mxu0 0.0
    %564 = vmatpush2.msra.mxu0 0.0
    %565 = vmatprep.subr.mxu0 0.0
    %566 = vmatpush2.msra.mxu0 0.0
    %567 = vmatprep.subr.mxu0 0.0
    %568 = vmatpush2.msra.mxu0 0.0
    %569 = vmatprep.subr.mxu0 0.0
    %570 = vmatpush2.msra.mxu0 0.0
    %571 = vmatprep.subr.mxu0 0.0
    %572 = vmatpush2.msra.mxu0 0.0
    %573 = vmatprep.mubr.f32.mxu0 0.0
    %574 = vmatmul.mubr.f32.gmra.mxu0 %v507
    %v575 = vpop.f32.mrf.mxu0
    %v576 = vadd.f32 0.0, %v575
    %v577 = vpop.f32.mrf.mxu0
    %578 = vdwg.mxu0
    %vm579 = vcmask 254976
    %580 = vst.msk [vmem:[#allocation8] sm:$0x3] %vm579, %v576
    // Predicated region
    $region42: #{tpu_custom_call.1} parent=1 // pred_check
      _
    $region43: #{tpu_custom_call.1} parent=1 // pred_check_branch
      %582 = sbr.rel (0) target = $region45
    $region44: #{tpu_custom_call.1} parent=1 // pred_region
      %s584 = ssub.s32 32, 32
      %585 = vsyncadd [#allocation4], %s584
      %s587 = sshll.u32 [#allocation8], 4
      %s588 = int_to_ptr.vmem [resolvable:$true] %s587
      %590 = dma.vmem_to_hbm [thread:$0]  %s588, 32, %s7, [#allocation4]
    $region45: #{tpu_custom_call.1} parent=1 // pred_fallthru
      _
    // Predicated region
    $region46: #{tpu_custom_call.1} parent=1 // pred_check
      _
    $region47: #{tpu_custom_call.1} parent=1 // pred_check_branch
      %592 = sbr.rel (0) target = $region49
    $region48: #{tpu_custom_call.1} parent=1 // pred_region
      %593 = dma.done [#allocation4], 32
    $region49: #{tpu_custom_call.1} parent=1 // pred_fallthru
      _
    %594 = vsyncpa [#allocation3], 1
    %595 = vsyncpa [#allocation6], 1
    %596 = vsyncpa [#allocation4], 1

</llo_original>
